<compile_context>
chip_gen: v5e
topology: v5e:2x2
jax: 0.10.0
libtpu: 0.0.40
codegen_flags: <defaults>
</compile_context>

<pallas_src>
import functools
import math

import jax
import jax.numpy as jnp
from jax.experimental import pallas as pl
from jax.experimental.pallas import tpu as pltpu

EMBED_SIZE = 32
HEADS = 4
HEAD_DIM = EMBED_SIZE // HEADS


# ---------------------------------------------------------------------------
# Kernel: NB batch elements per grid step, heads + fc_out fused inside.
# ---------------------------------------------------------------------------
def _attn_kernel(q_ref, k_ref, v_ref, m_ref, w_ref, b_ref, o_ref, *, heads, head_dim):
    nb, q_len, e_dim = q_ref.shape           # (NB, Q, E)
    k_len = k_ref.shape[1]

    # Packed weight tile [E, 4E]: wq_bd(scaled) | wk_bd | wv_bd | w_fc.T
    wq = w_ref[:, 0 * e_dim:1 * e_dim]
    wk = w_ref[:, 1 * e_dim:2 * e_dim]
    wv = w_ref[:, 2 * e_dim:3 * e_dim]
    wfc = w_ref[:, 3 * e_dim:4 * e_dim]

    # Block-diagonal projections as single [NB*L, E] x [E, E] MXU matmuls.
    q = jnp.dot(q_ref[...].reshape(nb * q_len, e_dim), wq,
                preferred_element_type=jnp.float32).reshape(nb, q_len, e_dim)
    k = jnp.dot(k_ref[...].reshape(nb * k_len, e_dim), wk,
                preferred_element_type=jnp.float32).reshape(nb, k_len, e_dim)
    v = jnp.dot(v_ref[...].reshape(nb * k_len, e_dim), wv,
                preferred_element_type=jnp.float32).reshape(nb, k_len, e_dim)

    # Hoisted mask bias: -1e20 where masked, 0 elsewhere (one compare+select total).
    mask_bias = jnp.where(m_ref[...] == 0, jnp.float32(-1e20), jnp.float32(0.0))

    acc = jnp.zeros((nb * q_len, e_dim), jnp.float32)
    for h in range(heads):                   # static unroll (H = 4)
        sl = slice(h * head_dim, (h + 1) * head_dim)
        qh, kh, vh = q[:, :, sl], k[:, :, sl], v[:, :, sl]
        # energy[b, q, k] = sum_d qh[b, q, d] * kh[b, k, d]   (batched over NB)
        energy = jnp.einsum("bqd,bkd->bqk", qh, kh,
                            preferred_element_type=jnp.float32) + mask_bias
        p = jnp.exp(energy - jnp.max(energy, axis=-1, keepdims=True))
        attn = p / jnp.sum(p, axis=-1, keepdims=True)        # exact divide
        oh = jnp.einsum("bqk,bkd->bqd", attn, vh,
                        preferred_element_type=jnp.float32)   # (NB, Q, D)
        # Accumulate this head's fc_out contribution (replaces concat + one big fc).
        acc = acc + jnp.dot(oh.reshape(nb * q_len, head_dim), wfc[sl, :],
                            preferred_element_type=jnp.float32)

    o_ref[...] = (acc + b_ref[...]).reshape(nb, q_len, e_dim)


# ---------------------------------------------------------------------------
# Glue (plain JAX, all jitted): mask padding + parameter prep + batch blocking
# ---------------------------------------------------------------------------
def adjust_mask_size(mask, target_rows, target_cols):
    """Pad mask to (target_rows, target_cols) with mask[-1, -1, -1] (head expansion is
    handled by broadcasting inside the kernel)."""
    pad_val = mask[-1, -1, -1]
    n, r, c = mask.shape
    if r < target_rows:
        mask = jnp.concatenate(
            [mask, jnp.full((n, target_rows - r, c), pad_val, mask.dtype)], axis=1)
    if c < target_cols:
        mask = jnp.concatenate(
            [mask, jnp.full((n, target_rows, target_cols - c), pad_val, mask.dtype)],
            axis=2)
    return mask


@functools.partial(jax.jit, static_argnames=("batch_block",))
def self_attention_pallas(values, keys, query, mask, params, batch_block=32):
    N, v_len, e_in = values.shape
    k_len = keys.shape[1]
    q_len = query.shape[1]
    H, D, E = HEADS, HEAD_DIM, EMBED_SIZE
    assert e_in == E
    assert v_len == k_len, "attention requires value_len == key_len"

    mask = adjust_mask_size(mask.astype(jnp.float32), q_len, k_len)

    # ---- batch blocking: NB elements per grid step, keep >= 2 steps when N >= 2 ----
    nb = min(batch_block, max(1, pl.cdiv(N, 2)))
    n_pad = pl.cdiv(N, nb) * nb
    if n_pad != N:
        pad = n_pad - N
        padz = lambda x: jnp.concatenate(
            [x, jnp.zeros((pad,) + x.shape[1:], x.dtype)], axis=0)
        query, keys, values = padz(query), padz(keys), padz(values)
        mask = jnp.concatenate(
            [mask, jnp.ones((pad, q_len, k_len), mask.dtype)], axis=0)

    # ---- weight prep: block-diagonal per-head weights, scale folded into wq, ----
    # ---- everything packed into a single lane-dense [E, 4E] tile.            ----
    eye_h = jnp.eye(H, dtype=jnp.float32)
    inv_scale = jnp.float32(1.0 / math.sqrt(E))
    wq_bd = jnp.kron(eye_h, params["wq"].T) * inv_scale
    wk_bd = jnp.kron(eye_h, params["wk"].T)
    wv_bd = jnp.kron(eye_h, params["wv"].T)
    w_all = jnp.concatenate([wq_bd, wk_bd, wv_bd, params["w_fc"].T], axis=1)  # [32,128]
    b_fc = params["b_fc"].reshape(1, E)

    kernel = functools.partial(_attn_kernel, heads=H, head_dim=D)

    out = pl.pallas_call(
        kernel,
        out_shape=jax.ShapeDtypeStruct((n_pad, q_len, E), jnp.float32),
        grid_spec=pltpu.PrefetchScalarGridSpec(
            num_scalar_prefetch=0,
            grid=(n_pad // nb,),
            in_specs=[
                pl.BlockSpec((nb, q_len, E), lambda n: (n, 0, 0)),        # query
                pl.BlockSpec((nb, k_len, E), lambda n: (n, 0, 0)),        # keys
                pl.BlockSpec((nb, v_len, E), lambda n: (n, 0, 0)),        # values
                pl.BlockSpec((nb, q_len, k_len), lambda n: (n, 0, 0)),    # mask
                pl.BlockSpec((E, 4 * E), lambda n: (0, 0)),               # packed weights
                pl.BlockSpec((1, E), lambda n: (0, 0)),                   # fc bias
            ],
            out_specs=pl.BlockSpec((nb, q_len, E), lambda n: (n, 0, 0)),
        ),
        compiler_params=pltpu.CompilerParams(dimension_semantics=("parallel",)),
    )(query, keys, values, mask, w_all, b_fc)

    return out[:N]


# ---------------------------------------------------------------------------
# Pure-JAX reference (mirrors the PyTorch forward exactly)
# ---------------------------------------------------------------------------
def self_attention_ref(values, keys, query, mask, params):
    N = query.shape[0]
    v_len, k_len, q_len = values.shape[1], keys.shape[1], query.shape[1]
    H, D, E = HEADS, HEAD_DIM, EMBED_SIZE

    v = values.reshape(N, v_len, H, D) @ params["wv"].T
    k = keys.reshape(N, k_len, H, D) @ params["wk"].T
    q = query.reshape(N, q_len, H, D) @ params["wq"].T

    energy = jnp.einsum("nqhd,nkhd->nhqk", q, k)
    m = adjust_mask_size(mask, q_len, k_len)[:, None, :, :]  # expand over heads
    energy = jnp.where(m == 0, jnp.float32(-1e20), energy)
    attn = jax.nn.softmax(energy / math.sqrt(E), axis=3)
    out = jnp.einsum("nhql,nlhd->nqhd", attn, v).reshape(N, q_len, H * D)
    return out @ params["w_fc"].T + params["b_fc"]


# ---------------------------------------------------------------------------
if __name__ == "__main__":
    key = jax.random.PRNGKey(0)
    kv, kk, kq, km, k1, k2, k3, k4, k5 = jax.random.split(key, 9)

    N, SEQ = 8, 8   # N=8 -> nb=4, grid=(2,): exercises batch blocking + 2-step grid
    values = jax.random.normal(kv, (N, SEQ, EMBED_SIZE), jnp.float32)
    keys = jax.random.normal(kk, (N, SEQ, EMBED_SIZE), jnp.float32)
    query = jax.random.normal(kq, (N, SEQ, EMBED_SIZE), jnp.float32)
    # float mask with some zeros (masked positions) and ones elsewhere
    mask = (jax.random.uniform(km, (N, SEQ, SEQ)) > 0.3).astype(jnp.float32)

    # Deterministic parameter init (synthetic, not a checkpoint load).
    bound_head = 1.0 / math.sqrt(HEAD_DIM)
    bound_fc = 1.0 / math.sqrt(EMBED_SIZE)
    params = {
        "wv": jax.random.uniform(k1, (HEAD_DIM, HEAD_DIM), jnp.float32, -bound_head, bound_head),
        "wk": jax.random.uniform(k2, (HEAD_DIM, HEAD_DIM), jnp.float32, -bound_head, bound_head),
        "wq": jax.random.uniform(k3, (HEAD_DIM, HEAD_DIM), jnp.float32, -bound_head, bound_head),
        "w_fc": jax.random.uniform(k4, (EMBED_SIZE, EMBED_SIZE), jnp.float32, -bound_fc, bound_fc),
        "b_fc": jax.random.uniform(k5, (EMBED_SIZE,), jnp.float32, -bound_fc, bound_fc),
    }

    out = self_attention_pallas(values, keys, query, mask, params)
    out = jax.block_until_ready(out)

    ref = self_attention_ref(values, keys, query, mask, params)
    assert out.shape == (N, SEQ, EMBED_SIZE), out.shape
    # Exact softmax divide now -> tight tolerance vs the pure-JAX reference.
    assert jnp.allclose(out, ref, atol=1e-4, rtol=1e-4), "mismatch vs pure-JAX reference"

    print("KERNEL_OK")
</pallas_src>

<mosaic_0001>
module attributes {stable_mosaic.version = 11 : i64} {
  func.func @_attn_kernel(%arg0: i32, %arg1: memref<4x8x32xf32, #tpu.memory_space<vmem>>, %arg2: memref<4x8x32xf32, #tpu.memory_space<vmem>>, %arg3: memref<4x8x32xf32, #tpu.memory_space<vmem>>, %arg4: memref<4x8x8xf32, #tpu.memory_space<vmem>>, %arg5: memref<32x128xf32, #tpu.memory_space<vmem>>, %arg6: memref<1x32xf32, #tpu.memory_space<vmem>>, %arg7: memref<4x8x32xf32, #tpu.memory_space<vmem>>) attributes {dimension_semantics = [#tpu.dimension_semantics<parallel>], iteration_bounds = array<i64: 2>, scalar_prefetch = 0 : i64, scratch_operands = 0 : i64, tpu.core_type = #tpu.core_type<tc>, window_params = [{transform_indices = @transform_0, window_bounds = array<i64: 4, 8, 32>}, {transform_indices = @transform_1, window_bounds = array<i64: 4, 8, 32>}, {transform_indices = @transform_2, window_bounds = array<i64: 4, 8, 32>}, {transform_indices = @transform_3, window_bounds = array<i64: 4, 8, 8>}, {pipeline_mode = #tpu.pipeline_mode<synchronous>, transform_indices = @transform_4, window_bounds = array<i64: 32, 128>}, {pipeline_mode = #tpu.pipeline_mode<synchronous>, transform_indices = @transform_5, window_bounds = array<i64: 1, 32>}, {transform_indices = @transform_6, window_bounds = array<i64: 4, 8, 32>}]} {
    %c0 = arith.constant 0 : index
    %c0_0 = arith.constant 0 : index
    %0 = vector.load %arg5[%c0, %c0_0] : memref<32x128xf32, #tpu.memory_space<vmem>>, vector<32x32xf32>
    %c0_1 = arith.constant 0 : index
    %c32 = arith.constant 32 : index
    %1 = vector.load %arg5[%c0_1, %c32] : memref<32x128xf32, #tpu.memory_space<vmem>>, vector<32x32xf32>
    %c0_2 = arith.constant 0 : index
    %c64 = arith.constant 64 : index
    %2 = vector.load %arg5[%c0_2, %c64] : memref<32x128xf32, #tpu.memory_space<vmem>>, vector<32x32xf32>
    %c0_3 = arith.constant 0 : index
    %c96 = arith.constant 96 : index
    %3 = vector.load %arg5[%c0_3, %c96] : memref<32x128xf32, #tpu.memory_space<vmem>>, vector<32x32xf32>
    %c0_4 = arith.constant 0 : index
    %c0_5 = arith.constant 0 : index
    %c0_6 = arith.constant 0 : index
    %4 = vector.load %arg1[%c0_4, %c0_5, %c0_6] : memref<4x8x32xf32, #tpu.memory_space<vmem>>, vector<4x8x32xf32>
    %5 = vector.shape_cast %4 : vector<4x8x32xf32> to vector<32x32xf32>
    %cst = arith.constant dense<0.000000e+00> : vector<32x32xf32>
    %6 = tpu.matmul %5, %0, %cst {dimension_numbers = #tpu.dot_dimension_numbers<[1], [0], [0], [1], [0, 0, 1, 1], [], []>} : vector<32x32xf32>, vector<32x32xf32>, vector<32x32xf32> -> vector<32x32xf32>
    %7 = vector.shape_cast %6 : vector<32x32xf32> to vector<4x8x32xf32>
    %c0_7 = arith.constant 0 : index
    %c0_8 = arith.constant 0 : index
    %c0_9 = arith.constant 0 : index
    %8 = vector.load %arg2[%c0_7, %c0_8, %c0_9] : memref<4x8x32xf32, #tpu.memory_space<vmem>>, vector<4x8x32xf32>
    %9 = vector.shape_cast %8 : vector<4x8x32xf32> to vector<32x32xf32>
    %cst_10 = arith.constant dense<0.000000e+00> : vector<32x32xf32>
    %10 = tpu.matmul %9, %1, %cst_10 {dimension_numbers = #tpu.dot_dimension_numbers<[1], [0], [0], [1], [0, 0, 1, 1], [], []>} : vector<32x32xf32>, vector<32x32xf32>, vector<32x32xf32> -> vector<32x32xf32>
    %11 = vector.shape_cast %10 : vector<32x32xf32> to vector<4x8x32xf32>
    %c0_11 = arith.constant 0 : index
    %c0_12 = arith.constant 0 : index
    %c0_13 = arith.constant 0 : index
    %12 = vector.load %arg3[%c0_11, %c0_12, %c0_13] : memref<4x8x32xf32, #tpu.memory_space<vmem>>, vector<4x8x32xf32>
    %13 = vector.shape_cast %12 : vector<4x8x32xf32> to vector<32x32xf32>
    %cst_14 = arith.constant dense<0.000000e+00> : vector<32x32xf32>
    %14 = tpu.matmul %13, %2, %cst_14 {dimension_numbers = #tpu.dot_dimension_numbers<[1], [0], [0], [1], [0, 0, 1, 1], [], []>} : vector<32x32xf32>, vector<32x32xf32>, vector<32x32xf32> -> vector<32x32xf32>
    %15 = vector.shape_cast %14 : vector<32x32xf32> to vector<4x8x32xf32>
    %c0_15 = arith.constant 0 : index
    %c0_16 = arith.constant 0 : index
    %c0_17 = arith.constant 0 : index
    %16 = vector.load %arg4[%c0_15, %c0_16, %c0_17] : memref<4x8x8xf32, #tpu.memory_space<vmem>>, vector<4x8x8xf32>
    %cst_18 = arith.constant 0.000000e+00 : f32
    %17 = vector.broadcast %cst_18 : f32 to vector<4x8x8xf32>
    %18 = arith.cmpf oeq, %16, %17 : vector<4x8x8xf32>
    %cst_19 = arith.constant -1.000000e+20 : f32
    %cst_20 = arith.constant 0.000000e+00 : f32
    %19 = vector.broadcast %cst_19 : f32 to vector<4x8x8xf32>
    %20 = vector.broadcast %cst_20 : f32 to vector<4x8x8xf32>
    %21 = arith.select %18, %19, %20 : vector<4x8x8xi1>, vector<4x8x8xf32>
    %cst_21 = arith.constant 0.000000e+00 : f32
    %22 = vector.broadcast %cst_21 : f32 to vector<32x32xf32>
    %23 = vector.extract_strided_slice %7 {offsets = [0, 0, 0], sizes = [4, 8, 8], strides = [1, 1, 1]} : vector<4x8x32xf32> to vector<4x8x8xf32>
    %24 = vector.extract_strided_slice %11 {offsets = [0, 0, 0], sizes = [4, 8, 8], strides = [1, 1, 1]} : vector<4x8x32xf32> to vector<4x8x8xf32>
    %25 = vector.extract_strided_slice %15 {offsets = [0, 0, 0], sizes = [4, 8, 8], strides = [1, 1, 1]} : vector<4x8x32xf32> to vector<4x8x8xf32>
    "tpu.trace_start"() <{level = 10 : i32, message = "bqd,bkd->bqk"}> : () -> ()
    %cst_22 = arith.constant dense<0.000000e+00> : vector<4x8x8xf32>
    %26 = tpu.matmul %23, %24, %cst_22 {dimension_numbers = #tpu.dot_dimension_numbers<[2], [2], [1], [1], [0, 0, 0, 1, 1, 1], [0], [0]>} : vector<4x8x8xf32>, vector<4x8x8xf32>, vector<4x8x8xf32> -> vector<4x8x8xf32>
    "tpu.trace_stop"() : () -> ()
    %27 = arith.addf %26, %21 : vector<4x8x8xf32>
    %cst_23 = arith.constant dense<0xFF800000> : vector<4x8xf32>
    %28 = vector.multi_reduction <maximumf>, %27, %cst_23 [2] : vector<4x8x8xf32> to vector<4x8xf32>
    %29 = vector.shape_cast %28 : vector<4x8xf32> to vector<4x8x1xf32>
    %30 = vector.broadcast %29 : vector<4x8x1xf32> to vector<4x8x8xf32>
    %31 = arith.subf %27, %30 : vector<4x8x8xf32>
    %32 = math.exp %31 : vector<4x8x8xf32>
    %cst_24 = arith.constant dense<0.000000e+00> : vector<4x8xf32>
    %33 = vector.multi_reduction <add>, %32, %cst_24 [2] : vector<4x8x8xf32> to vector<4x8xf32>
    %34 = vector.shape_cast %33 : vector<4x8xf32> to vector<4x8x1xf32>
    %35 = vector.broadcast %34 : vector<4x8x1xf32> to vector<4x8x8xf32>
    %36 = arith.divf %32, %35 : vector<4x8x8xf32>
    "tpu.trace_start"() <{level = 10 : i32, message = "bqk,bkd->bqd"}> : () -> ()
    %cst_25 = arith.constant dense<0.000000e+00> : vector<4x8x8xf32>
    %37 = tpu.matmul %36, %25, %cst_25 {dimension_numbers = #tpu.dot_dimension_numbers<[2], [1], [1], [2], [0, 0, 0, 1, 1, 2], [0], [0]>} : vector<4x8x8xf32>, vector<4x8x8xf32>, vector<4x8x8xf32> -> vector<4x8x8xf32>
    "tpu.trace_stop"() : () -> ()
    %38 = vector.shape_cast %37 : vector<4x8x8xf32> to vector<32x8xf32>
    %39 = vector.extract_strided_slice %3 {offsets = [0, 0], sizes = [8, 32], strides = [1, 1]} : vector<32x32xf32> to vector<8x32xf32>
    %cst_26 = arith.constant dense<0.000000e+00> : vector<32x32xf32>
    %40 = tpu.matmul %38, %39, %cst_26 {dimension_numbers = #tpu.dot_dimension_numbers<[1], [0], [0], [1], [0, 0, 1, 1], [], []>} : vector<32x8xf32>, vector<8x32xf32>, vector<32x32xf32> -> vector<32x32xf32>
    %41 = arith.addf %22, %40 : vector<32x32xf32>
    %42 = vector.extract_strided_slice %7 {offsets = [0, 0, 8], sizes = [4, 8, 8], strides = [1, 1, 1]} : vector<4x8x32xf32> to vector<4x8x8xf32>
    %43 = vector.extract_strided_slice %11 {offsets = [0, 0, 8], sizes = [4, 8, 8], strides = [1, 1, 1]} : vector<4x8x32xf32> to vector<4x8x8xf32>
    %44 = vector.extract_strided_slice %15 {offsets = [0, 0, 8], sizes = [4, 8, 8], strides = [1, 1, 1]} : vector<4x8x32xf32> to vector<4x8x8xf32>
    "tpu.trace_start"() <{level = 10 : i32, message = "bqd,bkd->bqk"}> : () -> ()
    %cst_27 = arith.constant dense<0.000000e+00> : vector<4x8x8xf32>
    %45 = tpu.matmul %42, %43, %cst_27 {dimension_numbers = #tpu.dot_dimension_numbers<[2], [2], [1], [1], [0, 0, 0, 1, 1, 1], [0], [0]>} : vector<4x8x8xf32>, vector<4x8x8xf32>, vector<4x8x8xf32> -> vector<4x8x8xf32>
    "tpu.trace_stop"() : () -> ()
    %46 = arith.addf %45, %21 : vector<4x8x8xf32>
    %cst_28 = arith.constant dense<0xFF800000> : vector<4x8xf32>
    %47 = vector.multi_reduction <maximumf>, %46, %cst_28 [2] : vector<4x8x8xf32> to vector<4x8xf32>
    %48 = vector.shape_cast %47 : vector<4x8xf32> to vector<4x8x1xf32>
    %49 = vector.broadcast %48 : vector<4x8x1xf32> to vector<4x8x8xf32>
    %50 = arith.subf %46, %49 : vector<4x8x8xf32>
    %51 = math.exp %50 : vector<4x8x8xf32>
    %cst_29 = arith.constant dense<0.000000e+00> : vector<4x8xf32>
    %52 = vector.multi_reduction <add>, %51, %cst_29 [2] : vector<4x8x8xf32> to vector<4x8xf32>
    %53 = vector.shape_cast %52 : vector<4x8xf32> to vector<4x8x1xf32>
    %54 = vector.broadcast %53 : vector<4x8x1xf32> to vector<4x8x8xf32>
    %55 = arith.divf %51, %54 : vector<4x8x8xf32>
    "tpu.trace_start"() <{level = 10 : i32, message = "bqk,bkd->bqd"}> : () -> ()
    %cst_30 = arith.constant dense<0.000000e+00> : vector<4x8x8xf32>
    %56 = tpu.matmul %55, %44, %cst_30 {dimension_numbers = #tpu.dot_dimension_numbers<[2], [1], [1], [2], [0, 0, 0, 1, 1, 2], [0], [0]>} : vector<4x8x8xf32>, vector<4x8x8xf32>, vector<4x8x8xf32> -> vector<4x8x8xf32>
    "tpu.trace_stop"() : () -> ()
    %57 = vector.shape_cast %56 : vector<4x8x8xf32> to vector<32x8xf32>
    %58 = vector.extract_strided_slice %3 {offsets = [8, 0], sizes = [8, 32], strides = [1, 1]} : vector<32x32xf32> to vector<8x32xf32>
    %cst_31 = arith.constant dense<0.000000e+00> : vector<32x32xf32>
    %59 = tpu.matmul %57, %58, %cst_31 {dimension_numbers = #tpu.dot_dimension_numbers<[1], [0], [0], [1], [0, 0, 1, 1], [], []>} : vector<32x8xf32>, vector<8x32xf32>, vector<32x32xf32> -> vector<32x32xf32>
    %60 = arith.addf %41, %59 : vector<32x32xf32>
    %61 = vector.extract_strided_slice %7 {offsets = [0, 0, 16], sizes = [4, 8, 8], strides = [1, 1, 1]} : vector<4x8x32xf32> to vector<4x8x8xf32>
    %62 = vector.extract_strided_slice %11 {offsets = [0, 0, 16], sizes = [4, 8, 8], strides = [1, 1, 1]} : vector<4x8x32xf32> to vector<4x8x8xf32>
    %63 = vector.extract_strided_slice %15 {offsets = [0, 0, 16], sizes = [4, 8, 8], strides = [1, 1, 1]} : vector<4x8x32xf32> to vector<4x8x8xf32>
    "tpu.trace_start"() <{level = 10 : i32, message = "bqd,bkd->bqk"}> : () -> ()
    %cst_32 = arith.constant dense<0.000000e+00> : vector<4x8x8xf32>
    %64 = tpu.matmul %61, %62, %cst_32 {dimension_numbers = #tpu.dot_dimension_numbers<[2], [2], [1], [1], [0, 0, 0, 1, 1, 1], [0], [0]>} : vector<4x8x8xf32>, vector<4x8x8xf32>, vector<4x8x8xf32> -> vector<4x8x8xf32>
    "tpu.trace_stop"() : () -> ()
    %65 = arith.addf %64, %21 : vector<4x8x8xf32>
    %cst_33 = arith.constant dense<0xFF800000> : vector<4x8xf32>
    %66 = vector.multi_reduction <maximumf>, %65, %cst_33 [2] : vector<4x8x8xf32> to vector<4x8xf32>
    %67 = vector.shape_cast %66 : vector<4x8xf32> to vector<4x8x1xf32>
    %68 = vector.broadcast %67 : vector<4x8x1xf32> to vector<4x8x8xf32>
    %69 = arith.subf %65, %68 : vector<4x8x8xf32>
    %70 = math.exp %69 : vector<4x8x8xf32>
    %cst_34 = arith.constant dense<0.000000e+00> : vector<4x8xf32>
    %71 = vector.multi_reduction <add>, %70, %cst_34 [2] : vector<4x8x8xf32> to vector<4x8xf32>
    %72 = vector.shape_cast %71 : vector<4x8xf32> to vector<4x8x1xf32>
    %73 = vector.broadcast %72 : vector<4x8x1xf32> to vector<4x8x8xf32>
    %74 = arith.divf %70, %73 : vector<4x8x8xf32>
    "tpu.trace_start"() <{level = 10 : i32, message = "bqk,bkd->bqd"}> : () -> ()
    %cst_35 = arith.constant dense<0.000000e+00> : vector<4x8x8xf32>
    %75 = tpu.matmul %74, %63, %cst_35 {dimension_numbers = #tpu.dot_dimension_numbers<[2], [1], [1], [2], [0, 0, 0, 1, 1, 2], [0], [0]>} : vector<4x8x8xf32>, vector<4x8x8xf32>, vector<4x8x8xf32> -> vector<4x8x8xf32>
    "tpu.trace_stop"() : () -> ()
    %76 = vector.shape_cast %75 : vector<4x8x8xf32> to vector<32x8xf32>
    %77 = vector.extract_strided_slice %3 {offsets = [16, 0], sizes = [8, 32], strides = [1, 1]} : vector<32x32xf32> to vector<8x32xf32>
    %cst_36 = arith.constant dense<0.000000e+00> : vector<32x32xf32>
    %78 = tpu.matmul %76, %77, %cst_36 {dimension_numbers = #tpu.dot_dimension_numbers<[1], [0], [0], [1], [0, 0, 1, 1], [], []>} : vector<32x8xf32>, vector<8x32xf32>, vector<32x32xf32> -> vector<32x32xf32>
    %79 = arith.addf %60, %78 : vector<32x32xf32>
    %80 = vector.extract_strided_slice %7 {offsets = [0, 0, 24], sizes = [4, 8, 8], strides = [1, 1, 1]} : vector<4x8x32xf32> to vector<4x8x8xf32>
    %81 = vector.extract_strided_slice %11 {offsets = [0, 0, 24], sizes = [4, 8, 8], strides = [1, 1, 1]} : vector<4x8x32xf32> to vector<4x8x8xf32>
    %82 = vector.extract_strided_slice %15 {offsets = [0, 0, 24], sizes = [4, 8, 8], strides = [1, 1, 1]} : vector<4x8x32xf32> to vector<4x8x8xf32>
    "tpu.trace_start"() <{level = 10 : i32, message = "bqd,bkd->bqk"}> : () -> ()
    %cst_37 = arith.constant dense<0.000000e+00> : vector<4x8x8xf32>
    %83 = tpu.matmul %80, %81, %cst_37 {dimension_numbers = #tpu.dot_dimension_numbers<[2], [2], [1], [1], [0, 0, 0, 1, 1, 1], [0], [0]>} : vector<4x8x8xf32>, vector<4x8x8xf32>, vector<4x8x8xf32> -> vector<4x8x8xf32>
    "tpu.trace_stop"() : () -> ()
    %84 = arith.addf %83, %21 : vector<4x8x8xf32>
    %cst_38 = arith.constant dense<0xFF800000> : vector<4x8xf32>
    %85 = vector.multi_reduction <maximumf>, %84, %cst_38 [2] : vector<4x8x8xf32> to vector<4x8xf32>
    %86 = vector.shape_cast %85 : vector<4x8xf32> to vector<4x8x1xf32>
    %87 = vector.broadcast %86 : vector<4x8x1xf32> to vector<4x8x8xf32>
    %88 = arith.subf %84, %87 : vector<4x8x8xf32>
    %89 = math.exp %88 : vector<4x8x8xf32>
    %cst_39 = arith.constant dense<0.000000e+00> : vector<4x8xf32>
    %90 = vector.multi_reduction <add>, %89, %cst_39 [2] : vector<4x8x8xf32> to vector<4x8xf32>
    %91 = vector.shape_cast %90 : vector<4x8xf32> to vector<4x8x1xf32>
    %92 = vector.broadcast %91 : vector<4x8x1xf32> to vector<4x8x8xf32>
    %93 = arith.divf %89, %92 : vector<4x8x8xf32>
    "tpu.trace_start"() <{level = 10 : i32, message = "bqk,bkd->bqd"}> : () -> ()
    %cst_40 = arith.constant dense<0.000000e+00> : vector<4x8x8xf32>
    %94 = tpu.matmul %93, %82, %cst_40 {dimension_numbers = #tpu.dot_dimension_numbers<[2], [1], [1], [2], [0, 0, 0, 1, 1, 2], [0], [0]>} : vector<4x8x8xf32>, vector<4x8x8xf32>, vector<4x8x8xf32> -> vector<4x8x8xf32>
    "tpu.trace_stop"() : () -> ()
    %95 = vector.shape_cast %94 : vector<4x8x8xf32> to vector<32x8xf32>
    %96 = vector.extract_strided_slice %3 {offsets = [24, 0], sizes = [8, 32], strides = [1, 1]} : vector<32x32xf32> to vector<8x32xf32>
    %cst_41 = arith.constant dense<0.000000e+00> : vector<32x32xf32>
    %97 = tpu.matmul %95, %96, %cst_41 {dimension_numbers = #tpu.dot_dimension_numbers<[1], [0], [0], [1], [0, 0, 1, 1], [], []>} : vector<32x8xf32>, vector<8x32xf32>, vector<32x32xf32> -> vector<32x32xf32>
    %98 = arith.addf %79, %97 : vector<32x32xf32>
    %c0_42 = arith.constant 0 : index
    %c0_43 = arith.constant 0 : index
    %99 = vector.load %arg6[%c0_42, %c0_43] : memref<1x32xf32, #tpu.memory_space<vmem>>, vector<1x32xf32>
    %100 = vector.broadcast %99 : vector<1x32xf32> to vector<32x32xf32>
    %101 = arith.addf %98, %100 : vector<32x32xf32>
    %102 = vector.shape_cast %101 : vector<32x32xf32> to vector<4x8x32xf32>
    %c0_44 = arith.constant 0 : index
    %c0_45 = arith.constant 0 : index
    %c0_46 = arith.constant 0 : index
    %103 = vector.load %arg7[%c0_44, %c0_45, %c0_46] : memref<4x8x32xf32, #tpu.memory_space<vmem>>, vector<4x8x32xf32>
    tpu.vector_store %arg7[%c0_44, %c0_45, %c0_46], %102 {strides = array<i32>} : memref<4x8x32xf32, #tpu.memory_space<vmem>>, vector<4x8x32xf32>,
    return
  }
  func.func @transform_0(%arg0: i32) -> (i32, i32, i32) {
    %c0_i32 = arith.constant 0 : i32
    %c0_i32_0 = arith.constant 0 : i32
    %c0_i32_1 = arith.constant 0 : i32
    return %arg0, %c0_i32, %c0_i32_0 : i32, i32, i32
  }
  func.func @transform_1(%arg0: i32) -> (i32, i32, i32) {
    %c0_i32 = arith.constant 0 : i32
    %c0_i32_0 = arith.constant 0 : i32
    %c0_i32_1 = arith.constant 0 : i32
    return %arg0, %c0_i32, %c0_i32_0 : i32, i32, i32
  }
  func.func @transform_2(%arg0: i32) -> (i32, i32, i32) {
    %c0_i32 = arith.constant 0 : i32
    %c0_i32_0 = arith.constant 0 : i32
    %c0_i32_1 = arith.constant 0 : i32
    return %arg0, %c0_i32, %c0_i32_0 : i32, i32, i32
  }
  func.func @transform_3(%arg0: i32) -> (i32, i32, i32) {
    %c0_i32 = arith.constant 0 : i32
    %c0_i32_0 = arith.constant 0 : i32
    %c0_i32_1 = arith.constant 0 : i32
    return %arg0, %c0_i32, %c0_i32_0 : i32, i32, i32
  }
  func.func @transform_4(%arg0: i32) -> (i32, i32) {
    %c0_i32 = arith.constant 0 : i32
    %c0_i32_0 = arith.constant 0 : i32
    %c0_i32_1 = arith.constant 0 : i32
    return %c0_i32, %c0_i32_0 : i32, i32
  }
  func.func @transform_5(%arg0: i32) -> (i32, i32) {
    %c0_i32 = arith.constant 0 : i32
    %c0_i32_0 = arith.constant 0 : i32
    %c0_i32_1 = arith.constant 0 : i32
    return %c0_i32, %c0_i32_0 : i32, i32
  }
  func.func @transform_6(%arg0: i32) -> (i32, i32, i32) {
    %c0_i32 = arith.constant 0 : i32
    %c0_i32_0 = arith.constant 0 : i32
    %c0_i32_1 = arith.constant 0 : i32
    return %arg0, %c0_i32, %c0_i32_0 : i32, i32, i32
  }
}

</mosaic_0001>

<llo_original>
// kernel: self_attention_pallas.1
$region0: #{self_attention_pallas.1}
  #allocation0 [shape = 'u32[]', space=smem, size = 0x4, offset = 0x4, fixed_abs, tag = 'smem constant byte address 0x4 - core index']
  #allocation1 [shape = 'u32[72,128]{1,0:T(1,128)}', space=vmem, size = 0x9000, scoped, tag = 'internal scratch']
  %s0 = inlined_call_operand.vmem [shape: f32[8,8,32], index: 0, kind: input, shape index: {}]
  %s1 = inlined_call_operand.vmem [shape: f32[8,8,32], index: 1, kind: input, shape index: {}]
  %s2 = inlined_call_operand.vmem [shape: f32[8,8,32], index: 2, kind: input, shape index: {}]
  %s3 = inlined_call_operand.vmem [shape: f32[8,8,8], index: 3, kind: input, shape index: {}]
  %s4 = inlined_call_operand.vmem [shape: f32[32,128], index: 4, kind: input, shape index: {}]
  %s5 = inlined_call_operand.vmem [shape: f32[1,32], index: 5, kind: input, shape index: {}]
  %s6 = inlined_call_operand.hbm [shape: f32[8,8,32], index: 6, kind: output, shape index: {}]
  %s7 = sld [smem:[#allocation0]]
  $region57: #{self_attention_pallas.1} parent=0
    _
  %s9 = ssub.s32 1, %s7
  %s10 = scalar_select 0, %s9, %s7
  $region1: #{self_attention_pallas.1} parent=0
    #allocation2 [shape = 'u8[32768]{0}', space=vmem, size = 0x8000, scoped, tag = 'output window, operand 0']
    #allocation3 [shape = 's32[2]{0}', space=sflag, size = 0x8, scoped, tag = 'scoped memory for self_attention_pallas.1']
    %11 = vsyncpa [#allocation3], 0
    %s12 = scalar_lea.sflag [#allocation3], 1
    %13 = vsyncpa %s12, 0
    loop: start=0, step=1, limit=4
    $region2: #{self_attention_pallas.1} parent=1 // loop_pre_header
      _
    $region3: #{self_attention_pallas.1} parent=1 // loop_header
      %s15 = sphi 0, %s19
      %p16 = scmp.ge.s32.totalorder %s15, 4
      %s25 = sphi 0, %s27
      %s28 = sphi 0, %s25
      %s29 = sphi 0, %s28
      %s45 = sphi 0, %s29
      %s51 = sphi 0, %s53
      %s54 = sphi 0, %s51
      %s55 = sphi 0, %s54
      %s71 = sphi 0, %s55
      %s77 = sphi 0, %s79
      %s80 = sphi 0, %s77
      %s81 = sphi 0, %s80
      %s97 = sphi 0, %s81
      %s103 = sphi 0, %s105
      %s106 = sphi 0, %s103
      %s107 = sphi 0, %s106
      %s123 = sphi 0, %s107
      %s127 = sphi 0, %s127
      %s129 = sphi 0, %s127
      %s130 = sphi 0, %s129
      %s144 = sphi 0, %s130
      %s148 = sphi 0, %s148
      %s150 = sphi 0, %s148
      %s151 = sphi 0, %s150
      %s165 = sphi 0, %s151
      %s171 = sphi 0, %s173
      %s174 = sphi 0, %s171
      %s175 = sphi 0, %s174
      %s191 = sphi 0, %s175
    $region4: #{self_attention_pallas.1} parent=1 // loop_header_branch
      %18 = sbr.rel (%p16) target = $region8
    $region5: #{self_attention_pallas.1} parent=1 // loop_body
      %s20 = ssub.s32 %s15, 1
      %s21 = ssub.s32 %s15, 2
      %s22 = sadd.s32 %s15, 1
      %s23 = ssub.s32 %s15, %s22
      %p24 = scmp.eq.s32.totalorder %s23, 0
      %s26 = sadd.s32 %s25, 1
      %s27 = scalar_select %p24, %s25, %s26
      %p30 = pneg %p24
      %p31 = scmp.eq.s32.totalorder %s15, 1
      %p32 = por %p30, %p31
      %p33 = scmp.ne.s32.totalorder %s25, %s28
      %p34 = scmp.eq.s32.totalorder %s15, 0
      %p35 = por %p33, %p34
      %p36 = scmp.ne.s32.totalorder %s25, %s28
      %p37 = scmp.eq.s32.totalorder %s20, 1
      %p38 = por %p36, %p37
      %p39 = scmp.ne.s32.totalorder %s28, %s29
      %p40 = scmp.eq.s32.totalorder %s20, 0
      %p41 = por %p39, %p40
      %p42 = scmp.ne.s32.totalorder %s28, %s29
      %p43 = scmp.eq.s32.totalorder %s21, 1
      %p44 = por %p42, %p43
      %p46 = scmp.ne.s32.totalorder %s29, %s45
      %p47 = scmp.eq.s32.totalorder %s21, 0
      %p48 = por %p46, %p47
      %s49 = ssub.s32 %s15, %s22
      %p50 = scmp.eq.s32.totalorder %s49, 0
      %s52 = sadd.s32 %s51, 1
      %s53 = scalar_select %p50, %s51, %s52
      %p56 = pneg %p50
      %p57 = scmp.eq.s32.totalorder %s15, 1
      %p58 = por %p56, %p57
      %p59 = scmp.ne.s32.totalorder %s51, %s54
      %p60 = scmp.eq.s32.totalorder %s15, 0
      %p61 = por %p59, %p60
      %p62 = scmp.ne.s32.totalorder %s51, %s54
      %p63 = scmp.eq.s32.totalorder %s20, 1
      %p64 = por %p62, %p63
      %p65 = scmp.ne.s32.totalorder %s54, %s55
      %p66 = scmp.eq.s32.totalorder %s20, 0
      %p67 = por %p65, %p66
      %p68 = scmp.ne.s32.totalorder %s54, %s55
      %p69 = scmp.eq.s32.totalorder %s21, 1
      %p70 = por %p68, %p69
      %p72 = scmp.ne.s32.totalorder %s55, %s71
      %p73 = scmp.eq.s32.totalorder %s21, 0
      %p74 = por %p72, %p73
      %s75 = ssub.s32 %s15, %s22
      %p76 = scmp.eq.s32.totalorder %s75, 0
      %s78 = sadd.s32 %s77, 1
      %s79 = scalar_select %p76, %s77, %s78
      %p82 = pneg %p76
      %p83 = scmp.eq.s32.totalorder %s15, 1
      %p84 = por %p82, %p83
      %p85 = scmp.ne.s32.totalorder %s77, %s80
      %p86 = scmp.eq.s32.totalorder %s15, 0
      %p87 = por %p85, %p86
      %p88 = scmp.ne.s32.totalorder %s77, %s80
      %p89 = scmp.eq.s32.totalorder %s20, 1
      %p90 = por %p88, %p89
      %p91 = scmp.ne.s32.totalorder %s80, %s81
      %p92 = scmp.eq.s32.totalorder %s20, 0
      %p93 = por %p91, %p92
      %p94 = scmp.ne.s32.totalorder %s80, %s81
      %p95 = scmp.eq.s32.totalorder %s21, 1
      %p96 = por %p94, %p95
      %p98 = scmp.ne.s32.totalorder %s81, %s97
      %p99 = scmp.eq.s32.totalorder %s21, 0
      %p100 = por %p98, %p99
      %s101 = ssub.s32 %s15, %s22
      %p102 = scmp.eq.s32.totalorder %s101, 0
      %s104 = sadd.s32 %s103, 1
      %s105 = scalar_select %p102, %s103, %s104
      %p108 = pneg %p102
      %p109 = scmp.eq.s32.totalorder %s15, 1
      %p110 = por %p108, %p109
      %p111 = scmp.ne.s32.totalorder %s103, %s106
      %p112 = scmp.eq.s32.totalorder %s15, 0
      %p113 = por %p111, %p112
      %p114 = scmp.ne.s32.totalorder %s103, %s106
      %p115 = scmp.eq.s32.totalorder %s20, 1
      %p116 = por %p114, %p115
      %p117 = scmp.ne.s32.totalorder %s106, %s107
      %p118 = scmp.eq.s32.totalorder %s20, 0
      %p119 = por %p117, %p118
      %p120 = scmp.ne.s32.totalorder %s106, %s107
      %p121 = scmp.eq.s32.totalorder %s21, 1
      %p122 = por %p120, %p121
      %p124 = scmp.ne.s32.totalorder %s107, %s123
      %p125 = scmp.eq.s32.totalorder %s21, 0
      %p126 = por %p124, %p125
      %s128 = sadd.s32 %s127, 1
      %p131 = scmp.eq.s32.totalorder %s15, 1
      %p132 = scmp.ne.s32.totalorder %s127, %s129
      %p133 = scmp.eq.s32.totalorder %s15, 0
      %p134 = por %p132, %p133
      %p135 = scmp.ne.s32.totalorder %s127, %s129
      %p136 = scmp.eq.s32.totalorder %s20, 1
      %p137 = por %p135, %p136
      %p138 = scmp.ne.s32.totalorder %s129, %s130
      %p139 = scmp.eq.s32.totalorder %s20, 0
      %p140 = por %p138, %p139
      %p141 = scmp.ne.s32.totalorder %s129, %s130
      %p142 = scmp.eq.s32.totalorder %s21, 1
      %p143 = por %p141, %p142
      %p145 = scmp.ne.s32.totalorder %s130, %s144
      %p146 = scmp.eq.s32.totalorder %s21, 0
      %p147 = por %p145, %p146
      %s149 = sadd.s32 %s148, 1
      %p152 = scmp.eq.s32.totalorder %s15, 1
      %p153 = scmp.ne.s32.totalorder %s148, %s150
      %p154 = scmp.eq.s32.totalorder %s15, 0
      %p155 = por %p153, %p154
      %p156 = scmp.ne.s32.totalorder %s148, %s150
      %p157 = scmp.eq.s32.totalorder %s20, 1
      %p158 = por %p156, %p157
      %p159 = scmp.ne.s32.totalorder %s150, %s151
      %p160 = scmp.eq.s32.totalorder %s20, 0
      %p161 = por %p159, %p160
      %p162 = scmp.ne.s32.totalorder %s150, %s151
      %p163 = scmp.eq.s32.totalorder %s21, 1
      %p164 = por %p162, %p163
      %p166 = scmp.ne.s32.totalorder %s151, %s165
      %p167 = scmp.eq.s32.totalorder %s21, 0
      %p168 = por %p166, %p167
      %s169 = ssub.s32 %s15, %s22
      %p170 = scmp.eq.s32.totalorder %s169, 0
      %s172 = sadd.s32 %s171, 1
      %s173 = scalar_select %p170, %s171, %s172
      %p176 = pneg %p170
      %p177 = scmp.eq.s32.totalorder %s15, 1
      %p178 = por %p176, %p177
      %p179 = scmp.ne.s32.totalorder %s171, %s174
      %p180 = scmp.eq.s32.totalorder %s15, 0
      %p181 = por %p179, %p180
      %p182 = scmp.ne.s32.totalorder %s171, %s174
      %p183 = scmp.eq.s32.totalorder %s20, 1
      %p184 = por %p182, %p183
      %p185 = scmp.ne.s32.totalorder %s174, %s175
      %p186 = scmp.eq.s32.totalorder %s20, 0
      %p187 = por %p185, %p186
      %p188 = scmp.ne.s32.totalorder %s174, %s175
      %p189 = scmp.eq.s32.totalorder %s21, 1
      %p190 = por %p188, %p189
      %p192 = scmp.ne.s32.totalorder %s175, %s191
      %p193 = scmp.eq.s32.totalorder %s21, 0
      %p194 = por %p192, %p193
      %p195 = scmp.le.s32.totalorder 1, %s15
      %p196 = scmp.lt.s32.totalorder %s15, 3
      %p197 = pnand %p195, %p196
      %p198 = pneg %p197
      // Predicated region
      $region9: #{self_attention_pallas.1} parent=5 // pred_check
        _
      $region10: #{self_attention_pallas.1} parent=5 // pred_check_branch
        %200 = sbr.rel (%p197) target = $region12
      $region11: #{self_attention_pallas.1} parent=5 // pred_region
        %s201 = ssub.s32 %s15, 1
        // Predicated region
        $region13: #{self_attention_pallas.1} parent=11 // pred_check
          %p202 = pneg %p140
        $region14: #{self_attention_pallas.1} parent=11 // pred_check_branch
          %204 = sbr.rel (%p202) target = $region16
        $region15: #{self_attention_pallas.1} parent=11 // pred_region
          _
        $region16: #{self_attention_pallas.1} parent=11 // pred_fallthru
          _
        // Predicated region
        $region17: #{self_attention_pallas.1} parent=11 // pred_check
          %p205 = pneg %p161
        $region18: #{self_attention_pallas.1} parent=11 // pred_check_branch
          %207 = sbr.rel (%p205) target = $region20
        $region19: #{self_attention_pallas.1} parent=11 // pred_region
          _
        $region20: #{self_attention_pallas.1} parent=11 // pred_fallthru
          _
      $region12: #{self_attention_pallas.1} parent=5 // pred_fallthru
        _
      %p208 = scmp.lt.s32.totalorder %s15, 2
      // Predicated region
      $region21: #{self_attention_pallas.1} parent=5 // pred_check
        %p209 = pneg %p208
      $region22: #{self_attention_pallas.1} parent=5 // pred_check_branch
        %211 = sbr.rel (%p209) target = $region24
      $region23: #{self_attention_pallas.1} parent=5 // pred_region
        // Predicated region
        $region25: #{self_attention_pallas.1} parent=23 // pred_check
          %p212 = pneg %p35
        $region26: #{self_attention_pallas.1} parent=23 // pred_check_branch
          %214 = sbr.rel (%p212) target = $region28
        $region27: #{self_attention_pallas.1} parent=23 // pred_region
          %s215 = smul.u32 4, %s15
          %p216 = scmp.lt.s32.totalorder %s215, 7
          %s217 = scalar_select %p216, %s215, 7
          %s218 = smul.addr %s217, 8
          %s219 = scalar_lea.vmem %s0, %s218
          %s220 = smul.u32 4, %s15
        $region28: #{self_attention_pallas.1} parent=23 // pred_fallthru
          _
        // Predicated region
        $region29: #{self_attention_pallas.1} parent=23 // pred_check
          %p221 = pneg %p61
        $region30: #{self_attention_pallas.1} parent=23 // pred_check_branch
          %223 = sbr.rel (%p221) target = $region32
        $region31: #{self_attention_pallas.1} parent=23 // pred_region
          %s224 = smul.u32 4, %s15
          %p225 = scmp.lt.s32.totalorder %s224, 7
          %s226 = scalar_select %p225, %s224, 7
          %s227 = smul.addr %s226, 8
          %s228 = scalar_lea.vmem %s1, %s227
          %s229 = smul.u32 4, %s15
        $region32: #{self_attention_pallas.1} parent=23 // pred_fallthru
          _
        // Predicated region
        $region33: #{self_attention_pallas.1} parent=23 // pred_check
          %p230 = pneg %p87
        $region34: #{self_attention_pallas.1} parent=23 // pred_check_branch
          %232 = sbr.rel (%p230) target = $region36
        $region35: #{self_attention_pallas.1} parent=23 // pred_region
          %s233 = smul.u32 4, %s15
          %p234 = scmp.lt.s32.totalorder %s233, 7
          %s235 = scalar_select %p234, %s233, 7
          %s236 = smul.addr %s235, 8
          %s237 = scalar_lea.vmem %s2, %s236
          %s238 = smul.u32 4, %s15
        $region36: #{self_attention_pallas.1} parent=23 // pred_fallthru
          _
        // Predicated region
        $region37: #{self_attention_pallas.1} parent=23 // pred_check
          %p239 = pneg %p113
        $region38: #{self_attention_pallas.1} parent=23 // pred_check_branch
          %241 = sbr.rel (%p239) target = $region40
        $region39: #{self_attention_pallas.1} parent=23 // pred_region
          %s242 = smul.u32 4, %s15
          %p243 = scmp.lt.s32.totalorder %s242, 7
          %s244 = scalar_select %p243, %s242, 7
          %s245 = smul.addr %s244, 8
          %s246 = scalar_lea.vmem %s3, %s245
          %s247 = smul.u32 4, %s15
        $region40: #{self_attention_pallas.1} parent=23 // pred_fallthru
          _
      $region24: #{self_attention_pallas.1} parent=5 // pred_fallthru
        _
      %p248 = scmp.le.s32.totalorder 1, %s15
      %p249 = scmp.lt.s32.totalorder %s15, 3
      %p250 = pnand %p248, %p249
      %p251 = pneg %p250
      // Predicated region
      $region41: #{self_attention_pallas.1} parent=5 // pred_check
        _
      $region42: #{self_attention_pallas.1} parent=5 // pred_check_branch
        %253 = sbr.rel (%p250) target = $region44
      $region43: #{self_attention_pallas.1} parent=5 // pred_region
        %s254 = ssub.s32 %s15, 1
        %s255 = smul.u32 4, %s20
        %p256 = scmp.lt.s32.totalorder %s255, 7
        %s257 = scalar_select %p256, %s255, 7
        %s258 = smul.addr %s257, 8
        %s259 = scalar_lea.vmem %s0, %s258
        %p260 = pneg %p41
        %p261 = pneg %p38
        %s262 = smul.u32 4, %s20
        %p263 = scmp.lt.s32.totalorder %s262, 7
        %s264 = scalar_select %p263, %s262, 7
        %s265 = smul.addr %s264, 8
        %s266 = scalar_lea.vmem %s1, %s265
        %p267 = pneg %p67
        %p268 = pneg %p64
        %s269 = smul.u32 4, %s20
        %p270 = scmp.lt.s32.totalorder %s269, 7
        %s271 = scalar_select %p270, %s269, 7
        %s272 = smul.addr %s271, 8
        %s273 = scalar_lea.vmem %s2, %s272
        %p274 = pneg %p93
        %p275 = pneg %p90
        %s276 = smul.u32 4, %s20
        %p277 = scmp.lt.s32.totalorder %s276, 7
        %s278 = scalar_select %p277, %s276, 7
        %s279 = smul.addr %s278, 8
        %s280 = scalar_lea.vmem %s3, %s279
        %p281 = pneg %p119
        %p282 = pneg %p116
        %p283 = pneg %p140
        %p284 = pneg %p137
        %p285 = pneg %p161
        %p286 = pneg %p158
        %p287 = pneg %p187
        %p288 = pneg %p184
        %s289 = sand.u32 %s174, 1
        %s290 = scalar_lea.sflag [#allocation3], %s289
        %s291 = sand.u32 %s174, 1
        %s292 = smul.addr %s291, 32
        %s293 = scalar_lea.vmem [#allocation2], %s292
        %s294 = smul.u32 4, %s20
        %p295 = scmp.lt.s32.totalorder %s294, 7
        %s296 = scalar_select %p295, %s294, 7
        %s297 = smul.addr %s296, 8
        %s298 = scalar_lea.vmem %s0, %s297
        %s299 = smul.u32 4, %s20
        %s300 = smul.u32 4, %s20
        %p301 = scmp.lt.s32.totalorder %s300, 7
        %s302 = scalar_select %p301, %s300, 7
        %s303 = smul.addr %s302, 8
        %s304 = scalar_lea.vmem %s1, %s303
        %s305 = smul.u32 4, %s20
        %s306 = smul.u32 4, %s20
        %p307 = scmp.lt.s32.totalorder %s306, 7
        %s308 = scalar_select %p307, %s306, 7
        %s309 = smul.addr %s308, 8
        %s310 = scalar_lea.vmem %s2, %s309
        %s311 = smul.u32 4, %s20
        %s312 = smul.u32 4, %s20
        %p313 = scmp.lt.s32.totalorder %s312, 7
        %s314 = scalar_select %p313, %s312, 7
        %s315 = smul.addr %s314, 8
        %s316 = scalar_lea.vmem %s3, %s315
        %s317 = smul.u32 4, %s20
        %s318 = smul.u32 4, %s20
        %v319 = vld [vmem:[%s4] sm:$0xff]
        %v320 = vld [vmem:[%s4 + $0x8] sm:$0xff]
        %v321 = vld [vmem:[%s4 + $0x10] sm:$0xff]
        %v322 = vld [vmem:[%s4 + $0x18] sm:$0xff]
        %v323 = vld [vmem:[%s298] sm:$0xff]
        %v324 = vld [vmem:[%s298 + $0x8] sm:$0xff]
        %v325 = vld [vmem:[%s298 + $0x10] sm:$0xff]
        %v326 = vld [vmem:[%s298 + $0x18] sm:$0xff]
        %vm327 = vcmask 261120
        %v329 = vsel %vm327, %v323, 0
        %v332 = vsel %vm327, %v324, 0
        %v335 = vsel %vm327, %v325, 0
        %v338 = vsel %vm327, %v326, 0
        %340 = vmatpush.msra.mxu0 0.0
        %341 = vmatpush.msra.mxu0 0.0
        %342 = vmatpush.msra.mxu0 0.0
        %343 = vmatpush.msra.mxu0 0.0
        %344 = vmatpush.msra.mxu0 0.0
        %345 = vmatpush.msra.mxu0 0.0
        %346 = vmatpush.msra.mxu0 0.0
        %347 = vmatpush.msra.mxu0 0.0
        %348 = vmatpush.msra.mxu0 0.0
        %349 = vmatpush.msra.mxu0 0.0
        %350 = vmatpush.msra.mxu0 0.0
        %351 = vmatpush.msra.mxu0 0.0
        %352 = vmatpush.msra.mxu0 %v322
        %353 = vmatpush.msra.mxu0 %v321
        %354 = vmatpush.msra.mxu0 %v320
        %355 = vmatpush.msra.mxu0 %v319
        %356 = vmatmul.f32.gmra.mxu0 %v329
        %v357 = vpop.f32.mrf.mxu0
        %v358 = vadd.f32 0.0, %v357
        %359 = vmatmul.f32.gmra.mxu0 %v332
        %v360 = vpop.f32.mrf.mxu0
        %v361 = vadd.f32 0.0, %v360
        %362 = vmatmul.f32.gmra.mxu0 %v335
        %v363 = vpop.f32.mrf.mxu0
        %v364 = vadd.f32 0.0, %v363
        %365 = vmatmul.f32.gmra.mxu0 %v338
        %v366 = vpop.f32.mrf.mxu0
        %v367 = vadd.f32 0.0, %v366
        %368 = vdwg.mxu0
        %v369 = vld [vmem:[%s304] sm:$0xff]
        %v370 = vld [vmem:[%s304 + $0x8] sm:$0xff]
        %v371 = vld [vmem:[%s304 + $0x10] sm:$0xff]
        %v372 = vld [vmem:[%s304 + $0x18] sm:$0xff]
        %377 = vrot.lane.b32.xlu0 %v319, 96
        %v378 = vpop.permute.xlu0 %377
        %379 = vrot.lane.b32.xlu0 %v320, 96
        %v380 = vpop.permute.xlu0 %379
        %381 = vrot.lane.b32.xlu0 %v321, 96
        %v382 = vpop.permute.xlu0 %381
        %383 = vrot.lane.b32.xlu0 %v322, 96
        %v384 = vpop.permute.xlu0 %383
        %v390 = vsel %vm327, %v369, 0
        %v393 = vsel %vm327, %v370, 0
        %v396 = vsel %vm327, %v371, 0
        %v399 = vsel %vm327, %v372, 0
        %401 = vmatpush.msra.mxu0 0.0
        %402 = vmatpush.msra.mxu0 0.0
        %403 = vmatpush.msra.mxu0 0.0
        %404 = vmatpush.msra.mxu0 0.0
        %405 = vmatpush.msra.mxu0 0.0
        %406 = vmatpush.msra.mxu0 0.0
        %407 = vmatpush.msra.mxu0 0.0
        %408 = vmatpush.msra.mxu0 0.0
        %409 = vmatpush.msra.mxu0 0.0
        %410 = vmatpush.msra.mxu0 0.0
        %411 = vmatpush.msra.mxu0 0.0
        %412 = vmatpush.msra.mxu0 0.0
        %413 = vmatpush.msra.mxu0 %v384
        %414 = vmatpush.msra.mxu0 %v382
        %415 = vmatpush.msra.mxu0 %v380
        %416 = vmatpush.msra.mxu0 %v378
        %417 = vmatmul.f32.gmra.mxu0 %v390
        %v418 = vpop.f32.mrf.mxu0
        %v419 = vadd.f32 0.0, %v418
        %420 = vmatmul.f32.gmra.mxu0 %v393
        %v421 = vpop.f32.mrf.mxu0
        %v422 = vadd.f32 0.0, %v421
        %423 = vmatmul.f32.gmra.mxu0 %v396
        %v424 = vpop.f32.mrf.mxu0
        %v425 = vadd.f32 0.0, %v424
        %426 = vmatmul.f32.gmra.mxu0 %v399
        %v427 = vpop.f32.mrf.mxu0
        %v428 = vadd.f32 0.0, %v427
        %429 = vdwg.mxu0
        %v430 = vld [vmem:[%s310] sm:$0xff]
        %v431 = vld [vmem:[%s310 + $0x8] sm:$0xff]
        %v432 = vld [vmem:[%s310 + $0x10] sm:$0xff]
        %v433 = vld [vmem:[%s310 + $0x18] sm:$0xff]
        %434 = vrot.lane.b32.xlu0 %v319, 64
        %v435 = vpop.permute.xlu0 %434
        %436 = vrot.lane.b32.xlu0 %v320, 64
        %v437 = vpop.permute.xlu0 %436
        %438 = vrot.lane.b32.xlu0 %v321, 64
        %v439 = vpop.permute.xlu0 %438
        %440 = vrot.lane.b32.xlu0 %v322, 64
        %v441 = vpop.permute.xlu0 %440
        %v447 = vsel %vm327, %v430, 0
        %v450 = vsel %vm327, %v431, 0
        %v453 = vsel %vm327, %v432, 0
        %v456 = vsel %vm327, %v433, 0
        %458 = vmatpush.msra.mxu0 0.0
        %459 = vmatpush.msra.mxu0 0.0
        %460 = vmatpush.msra.mxu0 0.0
        %461 = vmatpush.msra.mxu0 0.0
        %462 = vmatpush.msra.mxu0 0.0
        %463 = vmatpush.msra.mxu0 0.0
        %464 = vmatpush.msra.mxu0 0.0
        %465 = vmatpush.msra.mxu0 0.0
        %466 = vmatpush.msra.mxu0 0.0
        %467 = vmatpush.msra.mxu0 0.0
        %468 = vmatpush.msra.mxu0 0.0
        %469 = vmatpush.msra.mxu0 0.0
        %470 = vmatpush.msra.mxu0 %v441
        %471 = vmatpush.msra.mxu0 %v439
        %472 = vmatpush.msra.mxu0 %v437
        %473 = vmatpush.msra.mxu0 %v435
        %474 = vmatmul.f32.gmra.mxu0 %v447
        %v475 = vpop.f32.mrf.mxu0
        %v476 = vadd.f32 0.0, %v475
        %477 = vmatmul.f32.gmra.mxu0 %v450
        %v478 = vpop.f32.mrf.mxu0
        %v479 = vadd.f32 0.0, %v478
        %480 = vmatmul.f32.gmra.mxu0 %v453
        %v481 = vpop.f32.mrf.mxu0
        %v482 = vadd.f32 0.0, %v481
        %483 = vmatmul.f32.gmra.mxu0 %v456
        %v484 = vpop.f32.mrf.mxu0
        %v485 = vadd.f32 0.0, %v484
        %486 = vdwg.mxu0
        %v487 = vld [vmem:[%s316] sm:$0xff]
        %v488 = vld [vmem:[%s316 + $0x8] sm:$0xff]
        %v489 = vld [vmem:[%s316 + $0x10] sm:$0xff]
        %v490 = vld [vmem:[%s316 + $0x18] sm:$0xff]
        %vm491 = vcmp.eq.f32.partialorder %v487, 0.0
        %vm492 = vcmp.eq.f32.partialorder %v488, 0.0
        %vm493 = vcmp.eq.f32.partialorder %v489, 0.0
        %vm494 = vcmp.eq.f32.partialorder %v490, 0.0
        %v495 = vsel %vm491, -1e+20, 0.0
        %v496 = vsel %vm492, -1e+20, 0.0
        %v497 = vsel %vm493, -1e+20, 0.0
        %v498 = vsel %vm494, -1e+20, 0.0
        %vm499 = vcmask 64512
        %v501 = vsel %vm499, %v358, 0
        %v504 = vsel %vm499, %v419, 0
        %506 = vmatpush.xpose.msra.mxu0 0.0
        %507 = vmatpush.xpose.msra.mxu0 0.0
        %508 = vmatpush.xpose.msra.mxu0 0.0
        %509 = vmatpush.xpose.msra.mxu0 0.0
        %510 = vmatpush.xpose.msra.mxu0 0.0
        %511 = vmatpush.xpose.msra.mxu0 0.0
        %512 = vmatpush.xpose.msra.mxu0 0.0
        %513 = vmatpush.xpose.msra.mxu0 0.0
        %514 = vmatpush.xpose.msra.mxu0 0.0
        %515 = vmatpush.xpose.msra.mxu0 0.0
        %516 = vmatpush.xpose.msra.mxu0 0.0
        %517 = vmatpush.xpose.msra.mxu0 0.0
        %518 = vmatpush.xpose.msra.mxu0 0.0
        %519 = vmatpush.xpose.msra.mxu0 0.0
        %520 = vmatpush.xpose.msra.mxu0 0.0
        %521 = vmatpush.xpose.msra.mxu0 %v504
        %522 = vmatmul.f32.gmra.mxu0 %v501
        %v523 = vpop.f32.mrf.mxu0
        %v524 = vadd.f32 %v495, %v523
        %525 = vdwg.mxu0
        %v527 = vsel %vm499, %v361, 0
        %v530 = vsel %vm499, %v422, 0
        %532 = vmatpush.xpose.msra.mxu0 0.0
        %533 = vmatpush.xpose.msra.mxu0 0.0
        %534 = vmatpush.xpose.msra.mxu0 0.0
        %535 = vmatpush.xpose.msra.mxu0 0.0
        %536 = vmatpush.xpose.msra.mxu0 0.0
        %537 = vmatpush.xpose.msra.mxu0 0.0
        %538 = vmatpush.xpose.msra.mxu0 0.0
        %539 = vmatpush.xpose.msra.mxu0 0.0
        %540 = vmatpush.xpose.msra.mxu0 0.0
        %541 = vmatpush.xpose.msra.mxu0 0.0
        %542 = vmatpush.xpose.msra.mxu0 0.0
        %543 = vmatpush.xpose.msra.mxu0 0.0
        %544 = vmatpush.xpose.msra.mxu0 0.0
        %545 = vmatpush.xpose.msra.mxu0 0.0
        %546 = vmatpush.xpose.msra.mxu0 0.0
        %547 = vmatpush.xpose.msra.mxu0 %v530
        %548 = vmatmul.f32.gmra.mxu0 %v527
        %v549 = vpop.f32.mrf.mxu0
        %v550 = vadd.f32 %v496, %v549
        %551 = vdwg.mxu0
        %v553 = vsel %vm499, %v364, 0
        %v556 = vsel %vm499, %v425, 0
        %558 = vmatpush.xpose.msra.mxu0 0.0
        %559 = vmatpush.xpose.msra.mxu0 0.0
        %560 = vmatpush.xpose.msra.mxu0 0.0
        %561 = vmatpush.xpose.msra.mxu0 0.0
        %562 = vmatpush.xpose.msra.mxu0 0.0
        %563 = vmatpush.xpose.msra.mxu0 0.0
        %564 = vmatpush.xpose.msra.mxu0 0.0
        %565 = vmatpush.xpose.msra.mxu0 0.0
        %566 = vmatpush.xpose.msra.mxu0 0.0
        %567 = vmatpush.xpose.msra.mxu0 0.0
        %568 = vmatpush.xpose.msra.mxu0 0.0
        %569 = vmatpush.xpose.msra.mxu0 0.0
        %570 = vmatpush.xpose.msra.mxu0 0.0
        %571 = vmatpush.xpose.msra.mxu0 0.0
        %572 = vmatpush.xpose.msra.mxu0 0.0
        %573 = vmatpush.xpose.msra.mxu0 %v556
        %574 = vmatmul.f32.gmra.mxu0 %v553
        %v575 = vpop.f32.mrf.mxu0
        %v576 = vadd.f32 %v497, %v575
        %577 = vdwg.mxu0
        %v579 = vsel %vm499, %v367, 0
        %v582 = vsel %vm499, %v428, 0
        %584 = vmatpush.xpose.msra.mxu0 0.0
        %585 = vmatpush.xpose.msra.mxu0 0.0
        %586 = vmatpush.xpose.msra.mxu0 0.0
        %587 = vmatpush.xpose.msra.mxu0 0.0
        %588 = vmatpush.xpose.msra.mxu0 0.0
        %589 = vmatpush.xpose.msra.mxu0 0.0
        %590 = vmatpush.xpose.msra.mxu0 0.0
        %591 = vmatpush.xpose.msra.mxu0 0.0
        %592 = vmatpush.xpose.msra.mxu0 0.0
        %593 = vmatpush.xpose.msra.mxu0 0.0
        %594 = vmatpush.xpose.msra.mxu0 0.0
        %595 = vmatpush.xpose.msra.mxu0 0.0
        %596 = vmatpush.xpose.msra.mxu0 0.0
        %597 = vmatpush.xpose.msra.mxu0 0.0
        %598 = vmatpush.xpose.msra.mxu0 0.0
        %599 = vmatpush.xpose.msra.mxu0 %v582
        %600 = vmatmul.f32.gmra.mxu0 %v579
        %v601 = vpop.f32.mrf.mxu0
        %v602 = vadd.f32 %v498, %v601
        %603 = vdwg.mxu0
        %v604 = vsel %vm499, %v524, -inf
        %605 = vmax.xlane.f32.xlu0 %v604
        %v606 = vpop.xlane.xlu0 %605
        %v607 = vsel %vm499, %v550, -inf
        %608 = vmax.xlane.f32.xlu0 %v607
        %v609 = vpop.xlane.xlu0 %608
        %v610 = vsel %vm499, %v576, -inf
        %611 = vmax.xlane.f32.xlu0 %v610
        %v612 = vpop.xlane.xlu0 %611
        %v613 = vsel %vm499, %v602, -inf
        %614 = vmax.xlane.f32.xlu0 %v613
        %v615 = vpop.xlane.xlu0 %614
        %v616 = vsub.f32 %v524, %v606
        %v617 = vsub.f32 %v550, %v609
        %v618 = vsub.f32 %v576, %v612
        %v619 = vsub.f32 %v602, %v615
        %v620 = vmul.f32 %v616, 1.442695
        %v621 = vpow.pop %v620
        %v622 = vmul.f32 %v617, 1.442695
        %v623 = vpow.pop %v622
        %v624 = vmul.f32 %v618, 1.442695
        %v625 = vpow.pop %v624
        %v626 = vmul.f32 %v619, 1.442695
        %v627 = vpow.pop %v626
        %v628 = vsel %vm499, %v621, 0.0
        %629 = vadd.xlane.f32.xlu0 %v628
        %v630 = vpop.xlane.xlu0 %629
        %v631 = vsel %vm499, %v623, 0.0
        %632 = vadd.xlane.f32.xlu0 %v631
        %v633 = vpop.xlane.xlu0 %632
        %v634 = vsel %vm499, %v625, 0.0
        %635 = vadd.xlane.f32.xlu0 %v634
        %v636 = vpop.xlane.xlu0 %635
        %v637 = vsel %vm499, %v627, 0.0
        %638 = vadd.xlane.f32.xlu0 %v637
        %v639 = vpop.xlane.xlu0 %638
        %v640 = vrcp.pop %v630
        %v641 = vmul.f32 %v630, %v640
        %v642 = vsub.f32 1.0, %v641
        %v643 = vmul.f32 %v640, %v642
        %v644 = vadd.f32 %v640, %v643
        %vm645 = vweird.f32 %v630
        %vm646 = vweird.f32 %v640
        %vm647 = vmor %vm645, %vm646
        %v648 = vsel %vm647, %v640, %v644
        %v649 = vand.u32 2147483647, %v630
        %vm650 = vcmp.eq.f32.partialorder %v649, 8.507059e+37
        %v651 = vand.u32 %v630, 2147483648
        %v652 = vor.u32 1.1754944e-38, %v651
        %v653 = vsel %vm650, %v652, %v648
        %v654 = vmul.f32 %v621, %v653
        %v655 = vrcp.pop %v633
        %v656 = vmul.f32 %v633, %v655
        %v657 = vsub.f32 1.0, %v656
        %v658 = vmul.f32 %v655, %v657
        %v659 = vadd.f32 %v655, %v658
        %vm660 = vweird.f32 %v633
        %vm661 = vweird.f32 %v655
        %vm662 = vmor %vm660, %vm661
        %v663 = vsel %vm662, %v655, %v659
        %v664 = vand.u32 2147483647, %v633
        %vm665 = vcmp.eq.f32.partialorder %v664, 8.507059e+37
        %v666 = vand.u32 %v633, 2147483648
        %v667 = vor.u32 1.1754944e-38, %v666
        %v668 = vsel %vm665, %v667, %v663
        %v669 = vmul.f32 %v623, %v668
        %v670 = vrcp.pop %v636
        %v671 = vmul.f32 %v636, %v670
        %v672 = vsub.f32 1.0, %v671
        %v673 = vmul.f32 %v670, %v672
        %v674 = vadd.f32 %v670, %v673
        %vm675 = vweird.f32 %v636
        %vm676 = vweird.f32 %v670
        %vm677 = vmor %vm675, %vm676
        %v678 = vsel %vm677, %v670, %v674
        %v679 = vand.u32 2147483647, %v636
        %vm680 = vcmp.eq.f32.partialorder %v679, 8.507059e+37
        %v681 = vand.u32 %v636, 2147483648
        %v682 = vor.u32 1.1754944e-38, %v681
        %v683 = vsel %vm680, %v682, %v678
        %v684 = vmul.f32 %v625, %v683
        %v685 = vrcp.pop %v639
        %v686 = vmul.f32 %v639, %v685
        %v687 = vsub.f32 1.0, %v686
        %v688 = vmul.f32 %v685, %v687
        %v689 = vadd.f32 %v685, %v688
        %vm690 = vweird.f32 %v639
        %vm691 = vweird.f32 %v685
        %vm692 = vmor %vm690, %vm691
        %v693 = vsel %vm692, %v685, %v689
        %v694 = vand.u32 2147483647, %v639
        %vm695 = vcmp.eq.f32.partialorder %v694, 8.507059e+37
        %v696 = vand.u32 %v639, 2147483648
        %v697 = vor.u32 1.1754944e-38, %v696
        %v698 = vsel %vm695, %v697, %v693
        %v699 = vmul.f32 %v627, %v698
        %v701 = vsel %vm499, %v654, 0
        %703 = vmatpush.msra.mxu0 0.0
        %704 = vmatpush.msra.mxu0 0.0
        %705 = vmatpush.msra.mxu0 0.0
        %706 = vmatpush.msra.mxu0 0.0
        %707 = vmatpush.msra.mxu0 0.0
        %708 = vmatpush.msra.mxu0 0.0
        %709 = vmatpush.msra.mxu0 0.0
        %710 = vmatpush.msra.mxu0 0.0
        %711 = vmatpush.msra.mxu0 0.0
        %712 = vmatpush.msra.mxu0 0.0
        %713 = vmatpush.msra.mxu0 0.0
        %714 = vmatpush.msra.mxu0 0.0
        %715 = vmatpush.msra.mxu0 0.0
        %716 = vmatpush.msra.mxu0 0.0
        %717 = vmatpush.msra.mxu0 0.0
        %718 = vmatpush.msra.mxu0 %v476
        %719 = vmatmul.f32.gmra.mxu0 %v701
        %v720 = vpop.f32.mrf.mxu0
        %v721 = vadd.f32 0.0, %v720
        %722 = vdwg.mxu0
        %v724 = vsel %vm499, %v669, 0
        %726 = vmatpush.msra.mxu0 0.0
        %727 = vmatpush.msra.mxu0 0.0
        %728 = vmatpush.msra.mxu0 0.0
        %729 = vmatpush.msra.mxu0 0.0
        %730 = vmatpush.msra.mxu0 0.0
        %731 = vmatpush.msra.mxu0 0.0
        %732 = vmatpush.msra.mxu0 0.0
        %733 = vmatpush.msra.mxu0 0.0
        %734 = vmatpush.msra.mxu0 0.0
        %735 = vmatpush.msra.mxu0 0.0
        %736 = vmatpush.msra.mxu0 0.0
        %737 = vmatpush.msra.mxu0 0.0
        %738 = vmatpush.msra.mxu0 0.0
        %739 = vmatpush.msra.mxu0 0.0
        %740 = vmatpush.msra.mxu0 0.0
        %741 = vmatpush.msra.mxu0 %v479
        %742 = vmatmul.f32.gmra.mxu0 %v724
        %v743 = vpop.f32.mrf.mxu0
        %v744 = vadd.f32 0.0, %v743
        %745 = vdwg.mxu0
        %v747 = vsel %vm499, %v684, 0
        %749 = vmatpush.msra.mxu0 0.0
        %750 = vmatpush.msra.mxu0 0.0
        %751 = vmatpush.msra.mxu0 0.0
        %752 = vmatpush.msra.mxu0 0.0
        %753 = vmatpush.msra.mxu0 0.0
        %754 = vmatpush.msra.mxu0 0.0
        %755 = vmatpush.msra.mxu0 0.0
        %756 = vmatpush.msra.mxu0 0.0
        %757 = vmatpush.msra.mxu0 0.0
        %758 = vmatpush.msra.mxu0 0.0
        %759 = vmatpush.msra.mxu0 0.0
        %760 = vmatpush.msra.mxu0 0.0
        %761 = vmatpush.msra.mxu0 0.0
        %762 = vmatpush.msra.mxu0 0.0
        %763 = vmatpush.msra.mxu0 0.0
        %764 = vmatpush.msra.mxu0 %v482
        %765 = vmatmul.f32.gmra.mxu0 %v747
        %v766 = vpop.f32.mrf.mxu0
        %v767 = vadd.f32 0.0, %v766
        %768 = vdwg.mxu0
        %v770 = vsel %vm499, %v699, 0
        %772 = vmatpush.msra.mxu0 0.0
        %773 = vmatpush.msra.mxu0 0.0
        %774 = vmatpush.msra.mxu0 0.0
        %775 = vmatpush.msra.mxu0 0.0
        %776 = vmatpush.msra.mxu0 0.0
        %777 = vmatpush.msra.mxu0 0.0
        %778 = vmatpush.msra.mxu0 0.0
        %779 = vmatpush.msra.mxu0 0.0
        %780 = vmatpush.msra.mxu0 0.0
        %781 = vmatpush.msra.mxu0 0.0
        %782 = vmatpush.msra.mxu0 0.0
        %783 = vmatpush.msra.mxu0 0.0
        %784 = vmatpush.msra.mxu0 0.0
        %785 = vmatpush.msra.mxu0 0.0
        %786 = vmatpush.msra.mxu0 0.0
        %787 = vmatpush.msra.mxu0 %v485
        %788 = vmatmul.f32.gmra.mxu0 %v770
        %v789 = vpop.f32.mrf.mxu0
        %v790 = vadd.f32 0.0, %v789
        %791 = vdwg.mxu0
        %792 = vrot.lane.b32.xlu0 %v358, 120
        %v793 = vpop.permute.xlu0 %792
        %794 = vrot.lane.b32.xlu0 %v419, 120
        %v795 = vpop.permute.xlu0 %794
        %v796 = vsel %vm499, %v793, 0
        %v798 = vsel %vm499, %v795, 0
        %800 = vmatpush.xpose.msra.mxu0 0.0
        %801 = vmatpush.xpose.msra.mxu0 0.0
        %802 = vmatpush.xpose.msra.mxu0 0.0
        %803 = vmatpush.xpose.msra.mxu0 0.0
        %804 = vmatpush.xpose.msra.mxu0 0.0
        %805 = vmatpush.xpose.msra.mxu0 0.0
        %806 = vmatpush.xpose.msra.mxu0 0.0
        %807 = vmatpush.xpose.msra.mxu0 0.0
        %808 = vmatpush.xpose.msra.mxu0 0.0
        %809 = vmatpush.xpose.msra.mxu0 0.0
        %810 = vmatpush.xpose.msra.mxu0 0.0
        %811 = vmatpush.xpose.msra.mxu0 0.0
        %812 = vmatpush.xpose.msra.mxu0 0.0
        %813 = vmatpush.xpose.msra.mxu0 0.0
        %814 = vmatpush.xpose.msra.mxu0 0.0
        %815 = vmatpush.xpose.msra.mxu0 %v798
        %816 = vmatmul.f32.gmra.mxu0 %v796
        %v817 = vpop.f32.mrf.mxu0
        %v818 = vadd.f32 %v495, %v817
        %819 = vdwg.mxu0
        %820 = vrot.lane.b32.xlu0 %v361, 120
        %v821 = vpop.permute.xlu0 %820
        %822 = vrot.lane.b32.xlu0 %v422, 120
        %v823 = vpop.permute.xlu0 %822
        %v824 = vsel %vm499, %v821, 0
        %v826 = vsel %vm499, %v823, 0
        %828 = vmatpush.xpose.msra.mxu0 0.0
        %829 = vmatpush.xpose.msra.mxu0 0.0
        %830 = vmatpush.xpose.msra.mxu0 0.0
        %831 = vmatpush.xpose.msra.mxu0 0.0
        %832 = vmatpush.xpose.msra.mxu0 0.0
        %833 = vmatpush.xpose.msra.mxu0 0.0
        %834 = vmatpush.xpose.msra.mxu0 0.0
        %835 = vmatpush.xpose.msra.mxu0 0.0
        %836 = vmatpush.xpose.msra.mxu0 0.0
        %837 = vmatpush.xpose.msra.mxu0 0.0
        %838 = vmatpush.xpose.msra.mxu0 0.0
        %839 = vmatpush.xpose.msra.mxu0 0.0
        %840 = vmatpush.xpose.msra.mxu0 0.0
        %841 = vmatpush.xpose.msra.mxu0 0.0
        %842 = vmatpush.xpose.msra.mxu0 0.0
        %843 = vmatpush.xpose.msra.mxu0 %v826
        %844 = vmatmul.f32.gmra.mxu0 %v824
        %v845 = vpop.f32.mrf.mxu0
        %v846 = vadd.f32 %v496, %v845
        %847 = vdwg.mxu0
        %848 = vrot.lane.b32.xlu0 %v364, 120
        %v849 = vpop.permute.xlu0 %848
        %850 = vrot.lane.b32.xlu0 %v425, 120
        %v851 = vpop.permute.xlu0 %850
        %v852 = vsel %vm499, %v849, 0
        %v854 = vsel %vm499, %v851, 0
        %856 = vmatpush.xpose.msra.mxu0 0.0
        %857 = vmatpush.xpose.msra.mxu0 0.0
        %858 = vmatpush.xpose.msra.mxu0 0.0
        %859 = vmatpush.xpose.msra.mxu0 0.0
        %860 = vmatpush.xpose.msra.mxu0 0.0
        %861 = vmatpush.xpose.msra.mxu0 0.0
        %862 = vmatpush.xpose.msra.mxu0 0.0
        %863 = vmatpush.xpose.msra.mxu0 0.0
        %864 = vmatpush.xpose.msra.mxu0 0.0
        %865 = vmatpush.xpose.msra.mxu0 0.0
        %866 = vmatpush.xpose.msra.mxu0 0.0
        %867 = vmatpush.xpose.msra.mxu0 0.0
        %868 = vmatpush.xpose.msra.mxu0 0.0
        %869 = vmatpush.xpose.msra.mxu0 0.0
        %870 = vmatpush.xpose.msra.mxu0 0.0
        %871 = vmatpush.xpose.msra.mxu0 %v854
        %872 = vmatmul.f32.gmra.mxu0 %v852
        %v873 = vpop.f32.mrf.mxu0
        %v874 = vadd.f32 %v497, %v873
        %875 = vdwg.mxu0
        %876 = vrot.lane.b32.xlu0 %v367, 120
        %v877 = vpop.permute.xlu0 %876
        %878 = vrot.lane.b32.xlu0 %v428, 120
        %v879 = vpop.permute.xlu0 %878
        %v880 = vsel %vm499, %v877, 0
        %v882 = vsel %vm499, %v879, 0
        %884 = vmatpush.xpose.msra.mxu0 0.0
        %885 = vmatpush.xpose.msra.mxu0 0.0
        %886 = vmatpush.xpose.msra.mxu0 0.0
        %887 = vmatpush.xpose.msra.mxu0 0.0
        %888 = vmatpush.xpose.msra.mxu0 0.0
        %889 = vmatpush.xpose.msra.mxu0 0.0
        %890 = vmatpush.xpose.msra.mxu0 0.0
        %891 = vmatpush.xpose.msra.mxu0 0.0
        %892 = vmatpush.xpose.msra.mxu0 0.0
        %893 = vmatpush.xpose.msra.mxu0 0.0
        %894 = vmatpush.xpose.msra.mxu0 0.0
        %895 = vmatpush.xpose.msra.mxu0 0.0
        %896 = vmatpush.xpose.msra.mxu0 0.0
        %897 = vmatpush.xpose.msra.mxu0 0.0
        %898 = vmatpush.xpose.msra.mxu0 0.0
        %899 = vmatpush.xpose.msra.mxu0 %v882
        %900 = vmatmul.f32.gmra.mxu0 %v880
        %v901 = vpop.f32.mrf.mxu0
        %v902 = vadd.f32 %v498, %v901
        %903 = vdwg.mxu0
        %v904 = vsel %vm499, %v818, -inf
        %905 = vmax.xlane.f32.xlu0 %v904
        %v906 = vpop.xlane.xlu0 %905
        %v907 = vsel %vm499, %v846, -inf
        %908 = vmax.xlane.f32.xlu0 %v907
        %v909 = vpop.xlane.xlu0 %908
        %v910 = vsel %vm499, %v874, -inf
        %911 = vmax.xlane.f32.xlu0 %v910
        %v912 = vpop.xlane.xlu0 %911
        %v913 = vsel %vm499, %v902, -inf
        %914 = vmax.xlane.f32.xlu0 %v913
        %v915 = vpop.xlane.xlu0 %914
        %v916 = vsub.f32 %v818, %v906
        %v917 = vsub.f32 %v846, %v909
        %v918 = vsub.f32 %v874, %v912
        %v919 = vsub.f32 %v902, %v915
        %v920 = vmul.f32 %v916, 1.442695
        %v921 = vpow.pop %v920
        %v922 = vmul.f32 %v917, 1.442695
        %v923 = vpow.pop %v922
        %v924 = vmul.f32 %v918, 1.442695
        %v925 = vpow.pop %v924
        %v926 = vmul.f32 %v919, 1.442695
        %v927 = vpow.pop %v926
        %v928 = vsel %vm499, %v921, 0.0
        %929 = vadd.xlane.f32.xlu0 %v928
        %v930 = vpop.xlane.xlu0 %929
        %v931 = vsel %vm499, %v923, 0.0
        %932 = vadd.xlane.f32.xlu0 %v931
        %v933 = vpop.xlane.xlu0 %932
        %v934 = vsel %vm499, %v925, 0.0
        %935 = vadd.xlane.f32.xlu0 %v934
        %v936 = vpop.xlane.xlu0 %935
        %v937 = vsel %vm499, %v927, 0.0
        %938 = vadd.xlane.f32.xlu0 %v937
        %v939 = vpop.xlane.xlu0 %938
        %v940 = vrcp.pop %v930
        %v941 = vmul.f32 %v930, %v940
        %v942 = vsub.f32 1.0, %v941
        %v943 = vmul.f32 %v940, %v942
        %v944 = vadd.f32 %v940, %v943
        %vm945 = vweird.f32 %v930
        %vm946 = vweird.f32 %v940
        %vm947 = vmor %vm945, %vm946
        %v948 = vsel %vm947, %v940, %v944
        %v949 = vand.u32 2147483647, %v930
        %vm950 = vcmp.eq.f32.partialorder %v949, 8.507059e+37
        %v951 = vand.u32 %v930, 2147483648
        %v952 = vor.u32 1.1754944e-38, %v951
        %v953 = vsel %vm950, %v952, %v948
        %v954 = vmul.f32 %v921, %v953
        %v955 = vrcp.pop %v933
        %v956 = vmul.f32 %v933, %v955
        %v957 = vsub.f32 1.0, %v956
        %v958 = vmul.f32 %v955, %v957
        %v959 = vadd.f32 %v955, %v958
        %vm960 = vweird.f32 %v933
        %vm961 = vweird.f32 %v955
        %vm962 = vmor %vm960, %vm961
        %v963 = vsel %vm962, %v955, %v959
        %v964 = vand.u32 2147483647, %v933
        %vm965 = vcmp.eq.f32.partialorder %v964, 8.507059e+37
        %v966 = vand.u32 %v933, 2147483648
        %v967 = vor.u32 1.1754944e-38, %v966
        %v968 = vsel %vm965, %v967, %v963
        %v969 = vmul.f32 %v923, %v968
        %v970 = vrcp.pop %v936
        %v971 = vmul.f32 %v936, %v970
        %v972 = vsub.f32 1.0, %v971
        %v973 = vmul.f32 %v970, %v972
        %v974 = vadd.f32 %v970, %v973
        %vm975 = vweird.f32 %v936
        %vm976 = vweird.f32 %v970
        %vm977 = vmor %vm975, %vm976
        %v978 = vsel %vm977, %v970, %v974
        %v979 = vand.u32 2147483647, %v936
        %vm980 = vcmp.eq.f32.partialorder %v979, 8.507059e+37
        %v981 = vand.u32 %v936, 2147483648
        %v982 = vor.u32 1.1754944e-38, %v981
        %v983 = vsel %vm980, %v982, %v978
        %v984 = vmul.f32 %v925, %v983
        %v985 = vrcp.pop %v939
        %v986 = vmul.f32 %v939, %v985
        %v987 = vsub.f32 1.0, %v986
        %v988 = vmul.f32 %v985, %v987
        %v989 = vadd.f32 %v985, %v988
        %vm990 = vweird.f32 %v939
        %vm991 = vweird.f32 %v985
        %vm992 = vmor %vm990, %vm991
        %v993 = vsel %vm992, %v985, %v989
        %v994 = vand.u32 2147483647, %v939
        %vm995 = vcmp.eq.f32.partialorder %v994, 8.507059e+37
        %v996 = vand.u32 %v939, 2147483648
        %v997 = vor.u32 1.1754944e-38, %v996
        %v998 = vsel %vm995, %v997, %v993
        %v999 = vmul.f32 %v927, %v998
        %1001 = vrot.lane.b32.xlu0 %v476, 120
        %v1002 = vpop.permute.xlu0 %1001
        %v1005 = vsel %vm499, %v954, 0
        %1007 = vmatpush.msra.mxu0 0.0
        %1008 = vmatpush.msra.mxu0 0.0
        %1009 = vmatpush.msra.mxu0 0.0
        %1010 = vmatpush.msra.mxu0 0.0
        %1011 = vmatpush.msra.mxu0 0.0
        %1012 = vmatpush.msra.mxu0 0.0
        %1013 = vmatpush.msra.mxu0 0.0
        %1014 = vmatpush.msra.mxu0 0.0
        %1015 = vmatpush.msra.mxu0 0.0
        %1016 = vmatpush.msra.mxu0 0.0
        %1017 = vmatpush.msra.mxu0 0.0
        %1018 = vmatpush.msra.mxu0 0.0
        %1019 = vmatpush.msra.mxu0 0.0
        %1020 = vmatpush.msra.mxu0 0.0
        %1021 = vmatpush.msra.mxu0 0.0
        %1022 = vmatpush.msra.mxu0 %v1002
        %1023 = vmatmul.f32.gmra.mxu0 %v1005
        %v1024 = vpop.f32.mrf.mxu0
        %v1025 = vadd.f32 0.0, %v1024
        %1026 = vdwg.mxu0
        %1028 = vrot.lane.b32.xlu0 %v479, 120
        %v1029 = vpop.permute.xlu0 %1028
        %v1032 = vsel %vm499, %v969, 0
        %1034 = vmatpush.msra.mxu0 0.0
        %1035 = vmatpush.msra.mxu0 0.0
        %1036 = vmatpush.msra.mxu0 0.0
        %1037 = vmatpush.msra.mxu0 0.0
        %1038 = vmatpush.msra.mxu0 0.0
        %1039 = vmatpush.msra.mxu0 0.0
        %1040 = vmatpush.msra.mxu0 0.0
        %1041 = vmatpush.msra.mxu0 0.0
        %1042 = vmatpush.msra.mxu0 0.0
        %1043 = vmatpush.msra.mxu0 0.0
        %1044 = vmatpush.msra.mxu0 0.0
        %1045 = vmatpush.msra.mxu0 0.0
        %1046 = vmatpush.msra.mxu0 0.0
        %1047 = vmatpush.msra.mxu0 0.0
        %1048 = vmatpush.msra.mxu0 0.0
        %1049 = vmatpush.msra.mxu0 %v1029
        %1050 = vmatmul.f32.gmra.mxu0 %v1032
        %v1051 = vpop.f32.mrf.mxu0
        %v1052 = vadd.f32 0.0, %v1051
        %1053 = vdwg.mxu0
        %1055 = vrot.lane.b32.xlu0 %v482, 120
        %v1056 = vpop.permute.xlu0 %1055
        %v1059 = vsel %vm499, %v984, 0
        %1061 = vmatpush.msra.mxu0 0.0
        %1062 = vmatpush.msra.mxu0 0.0
        %1063 = vmatpush.msra.mxu0 0.0
        %1064 = vmatpush.msra.mxu0 0.0
        %1065 = vmatpush.msra.mxu0 0.0
        %1066 = vmatpush.msra.mxu0 0.0
        %1067 = vmatpush.msra.mxu0 0.0
        %1068 = vmatpush.msra.mxu0 0.0
        %1069 = vmatpush.msra.mxu0 0.0
        %1070 = vmatpush.msra.mxu0 0.0
        %1071 = vmatpush.msra.mxu0 0.0
        %1072 = vmatpush.msra.mxu0 0.0
        %1073 = vmatpush.msra.mxu0 0.0
        %1074 = vmatpush.msra.mxu0 0.0
        %1075 = vmatpush.msra.mxu0 0.0
        %1076 = vmatpush.msra.mxu0 %v1056
        %1077 = vmatmul.f32.gmra.mxu0 %v1059
        %v1078 = vpop.f32.mrf.mxu0
        %v1079 = vadd.f32 0.0, %v1078
        %1080 = vdwg.mxu0
        %1082 = vrot.lane.b32.xlu0 %v485, 120
        %v1083 = vpop.permute.xlu0 %1082
        %v1086 = vsel %vm499, %v999, 0
        %1088 = vmatpush.msra.mxu0 0.0
        %1089 = vmatpush.msra.mxu0 0.0
        %1090 = vmatpush.msra.mxu0 0.0
        %1091 = vmatpush.msra.mxu0 0.0
        %1092 = vmatpush.msra.mxu0 0.0
        %1093 = vmatpush.msra.mxu0 0.0
        %1094 = vmatpush.msra.mxu0 0.0
        %1095 = vmatpush.msra.mxu0 0.0
        %1096 = vmatpush.msra.mxu0 0.0
        %1097 = vmatpush.msra.mxu0 0.0
        %1098 = vmatpush.msra.mxu0 0.0
        %1099 = vmatpush.msra.mxu0 0.0
        %1100 = vmatpush.msra.mxu0 0.0
        %1101 = vmatpush.msra.mxu0 0.0
        %1102 = vmatpush.msra.mxu0 0.0
        %1103 = vmatpush.msra.mxu0 %v1083
        %1104 = vmatmul.f32.gmra.mxu0 %v1086
        %v1105 = vpop.f32.mrf.mxu0
        %v1106 = vadd.f32 0.0, %v1105
        %1107 = vdwg.mxu0
        %1108 = vrot.lane.b32.xlu0 %v320, 32
        %v1109 = vpop.permute.xlu0 %1108
        %v1112 = vsel %vm499, %v1025, 0
        %v1115 = vsel %vm499, %v1052, 0
        %v1118 = vsel %vm499, %v1079, 0
        %v1121 = vsel %vm499, %v1106, 0
        %1123 = vmatpush.msra.mxu0 0.0
        %1124 = vmatpush.msra.mxu0 0.0
        %1125 = vmatpush.msra.mxu0 0.0
        %1126 = vmatpush.msra.mxu0 0.0
        %1127 = vmatpush.msra.mxu0 0.0
        %1128 = vmatpush.msra.mxu0 0.0
        %1129 = vmatpush.msra.mxu0 0.0
        %1130 = vmatpush.msra.mxu0 0.0
        %1131 = vmatpush.msra.mxu0 0.0
        %1132 = vmatpush.msra.mxu0 0.0
        %1133 = vmatpush.msra.mxu0 0.0
        %1134 = vmatpush.msra.mxu0 0.0
        %1135 = vmatpush.msra.mxu0 0.0
        %1136 = vmatpush.msra.mxu0 0.0
        %1137 = vmatpush.msra.mxu0 0.0
        %1138 = vmatpush.msra.mxu0 %v1109
        %1139 = vmatmul.f32.gmra.mxu0 %v1112
        %v1140 = vpop.f32.mrf.mxu0
        %v1141 = vadd.f32 0.0, %v1140
        %1142 = vmatmul.f32.gmra.mxu0 %v1115
        %v1143 = vpop.f32.mrf.mxu0
        %v1144 = vadd.f32 0.0, %v1143
        %1145 = vmatmul.f32.gmra.mxu0 %v1118
        %v1146 = vpop.f32.mrf.mxu0
        %v1147 = vadd.f32 0.0, %v1146
        %1148 = vmatmul.f32.gmra.mxu0 %v1121
        %v1149 = vpop.f32.mrf.mxu0
        %v1150 = vadd.f32 0.0, %v1149
        %1151 = vdwg.mxu0
        %1152 = vrot.lane.b32.xlu0 %v319, 32
        %v1153 = vpop.permute.xlu0 %1152
        %v1156 = vsel %vm499, %v721, 0
        %v1159 = vsel %vm499, %v744, 0
        %v1162 = vsel %vm499, %v767, 0
        %v1165 = vsel %vm499, %v790, 0
        %1167 = vmatpush.msra.mxu0 0.0
        %1168 = vmatpush.msra.mxu0 0.0
        %1169 = vmatpush.msra.mxu0 0.0
        %1170 = vmatpush.msra.mxu0 0.0
        %1171 = vmatpush.msra.mxu0 0.0
        %1172 = vmatpush.msra.mxu0 0.0
        %1173 = vmatpush.msra.mxu0 0.0
        %1174 = vmatpush.msra.mxu0 0.0
        %1175 = vmatpush.msra.mxu0 0.0
        %1176 = vmatpush.msra.mxu0 0.0
        %1177 = vmatpush.msra.mxu0 0.0
        %1178 = vmatpush.msra.mxu0 0.0
        %1179 = vmatpush.msra.mxu0 0.0
        %1180 = vmatpush.msra.mxu0 0.0
        %1181 = vmatpush.msra.mxu0 0.0
        %1182 = vmatpush.msra.mxu0 %v1153
        %1183 = vmatmul.f32.gmra.mxu0 %v1156
        %v1184 = vpop.f32.mrf.mxu0
        %v1185 = vadd.f32 %v1141, %v1184
        %1186 = vmatmul.f32.gmra.mxu0 %v1159
        %v1187 = vpop.f32.mrf.mxu0
        %v1188 = vadd.f32 %v1144, %v1187
        %1189 = vmatmul.f32.gmra.mxu0 %v1162
        %v1190 = vpop.f32.mrf.mxu0
        %v1191 = vadd.f32 %v1147, %v1190
        %1192 = vmatmul.f32.gmra.mxu0 %v1165
        %v1193 = vpop.f32.mrf.mxu0
        %v1194 = vadd.f32 %v1150, %v1193
        %1195 = vdwg.mxu0
        %1196 = vrot.lane.b32.xlu0 %v358, 112
        %v1197 = vpop.permute.xlu0 %1196
        %1198 = vrot.lane.b32.xlu0 %v419, 112
        %v1199 = vpop.permute.xlu0 %1198
        %v1200 = vsel %vm499, %v1197, 0
        %v1202 = vsel %vm499, %v1199, 0
        %1204 = vmatpush.xpose.msra.mxu0 0.0
        %1205 = vmatpush.xpose.msra.mxu0 0.0
        %1206 = vmatpush.xpose.msra.mxu0 0.0
        %1207 = vmatpush.xpose.msra.mxu0 0.0
        %1208 = vmatpush.xpose.msra.mxu0 0.0
        %1209 = vmatpush.xpose.msra.mxu0 0.0
        %1210 = vmatpush.xpose.msra.mxu0 0.0
        %1211 = vmatpush.xpose.msra.mxu0 0.0
        %1212 = vmatpush.xpose.msra.mxu0 0.0
        %1213 = vmatpush.xpose.msra.mxu0 0.0
        %1214 = vmatpush.xpose.msra.mxu0 0.0
        %1215 = vmatpush.xpose.msra.mxu0 0.0
        %1216 = vmatpush.xpose.msra.mxu0 0.0
        %1217 = vmatpush.xpose.msra.mxu0 0.0
        %1218 = vmatpush.xpose.msra.mxu0 0.0
        %1219 = vmatpush.xpose.msra.mxu0 %v1202
        %1220 = vmatmul.f32.gmra.mxu0 %v1200
        %v1221 = vpop.f32.mrf.mxu0
        %v1222 = vadd.f32 %v495, %v1221
        %1223 = vdwg.mxu0
        %1224 = vrot.lane.b32.xlu0 %v361, 112
        %v1225 = vpop.permute.xlu0 %1224
        %1226 = vrot.lane.b32.xlu0 %v422, 112
        %v1227 = vpop.permute.xlu0 %1226
        %v1228 = vsel %vm499, %v1225, 0
        %v1230 = vsel %vm499, %v1227, 0
        %1232 = vmatpush.xpose.msra.mxu0 0.0
        %1233 = vmatpush.xpose.msra.mxu0 0.0
        %1234 = vmatpush.xpose.msra.mxu0 0.0
        %1235 = vmatpush.xpose.msra.mxu0 0.0
        %1236 = vmatpush.xpose.msra.mxu0 0.0
        %1237 = vmatpush.xpose.msra.mxu0 0.0
        %1238 = vmatpush.xpose.msra.mxu0 0.0
        %1239 = vmatpush.xpose.msra.mxu0 0.0
        %1240 = vmatpush.xpose.msra.mxu0 0.0
        %1241 = vmatpush.xpose.msra.mxu0 0.0
        %1242 = vmatpush.xpose.msra.mxu0 0.0
        %1243 = vmatpush.xpose.msra.mxu0 0.0
        %1244 = vmatpush.xpose.msra.mxu0 0.0
        %1245 = vmatpush.xpose.msra.mxu0 0.0
        %1246 = vmatpush.xpose.msra.mxu0 0.0
        %1247 = vmatpush.xpose.msra.mxu0 %v1230
        %1248 = vmatmul.f32.gmra.mxu0 %v1228
        %v1249 = vpop.f32.mrf.mxu0
        %v1250 = vadd.f32 %v496, %v1249
        %1251 = vdwg.mxu0
        %1252 = vrot.lane.b32.xlu0 %v364, 112
        %v1253 = vpop.permute.xlu0 %1252
        %1254 = vrot.lane.b32.xlu0 %v425, 112
        %v1255 = vpop.permute.xlu0 %1254
        %v1256 = vsel %vm499, %v1253, 0
        %v1258 = vsel %vm499, %v1255, 0
        %1260 = vmatpush.xpose.msra.mxu0 0.0
        %1261 = vmatpush.xpose.msra.mxu0 0.0
        %1262 = vmatpush.xpose.msra.mxu0 0.0
        %1263 = vmatpush.xpose.msra.mxu0 0.0
        %1264 = vmatpush.xpose.msra.mxu0 0.0
        %1265 = vmatpush.xpose.msra.mxu0 0.0
        %1266 = vmatpush.xpose.msra.mxu0 0.0
        %1267 = vmatpush.xpose.msra.mxu0 0.0
        %1268 = vmatpush.xpose.msra.mxu0 0.0
        %1269 = vmatpush.xpose.msra.mxu0 0.0
        %1270 = vmatpush.xpose.msra.mxu0 0.0
        %1271 = vmatpush.xpose.msra.mxu0 0.0
        %1272 = vmatpush.xpose.msra.mxu0 0.0
        %1273 = vmatpush.xpose.msra.mxu0 0.0
        %1274 = vmatpush.xpose.msra.mxu0 0.0
        %1275 = vmatpush.xpose.msra.mxu0 %v1258
        %1276 = vmatmul.f32.gmra.mxu0 %v1256
        %v1277 = vpop.f32.mrf.mxu0
        %v1278 = vadd.f32 %v497, %v1277
        %1279 = vdwg.mxu0
        %1280 = vrot.lane.b32.xlu0 %v367, 112
        %v1281 = vpop.permute.xlu0 %1280
        %1282 = vrot.lane.b32.xlu0 %v428, 112
        %v1283 = vpop.permute.xlu0 %1282
        %v1284 = vsel %vm499, %v1281, 0
        %v1286 = vsel %vm499, %v1283, 0
        %1288 = vmatpush.xpose.msra.mxu0 0.0
        %1289 = vmatpush.xpose.msra.mxu0 0.0
        %1290 = vmatpush.xpose.msra.mxu0 0.0
        %1291 = vmatpush.xpose.msra.mxu0 0.0
        %1292 = vmatpush.xpose.msra.mxu0 0.0
        %1293 = vmatpush.xpose.msra.mxu0 0.0
        %1294 = vmatpush.xpose.msra.mxu0 0.0
        %1295 = vmatpush.xpose.msra.mxu0 0.0
        %1296 = vmatpush.xpose.msra.mxu0 0.0
        %1297 = vmatpush.xpose.msra.mxu0 0.0
        %1298 = vmatpush.xpose.msra.mxu0 0.0
        %1299 = vmatpush.xpose.msra.mxu0 0.0
        %1300 = vmatpush.xpose.msra.mxu0 0.0
        %1301 = vmatpush.xpose.msra.mxu0 0.0
        %1302 = vmatpush.xpose.msra.mxu0 0.0
        %1303 = vmatpush.xpose.msra.mxu0 %v1286
        %1304 = vmatmul.f32.gmra.mxu0 %v1284
        %v1305 = vpop.f32.mrf.mxu0
        %v1306 = vadd.f32 %v498, %v1305
        %1307 = vdwg.mxu0
        %v1308 = vsel %vm499, %v1222, -inf
        %1309 = vmax.xlane.f32.xlu0 %v1308
        %v1310 = vpop.xlane.xlu0 %1309
        %v1311 = vsel %vm499, %v1250, -inf
        %1312 = vmax.xlane.f32.xlu0 %v1311
        %v1313 = vpop.xlane.xlu0 %1312
        %v1314 = vsel %vm499, %v1278, -inf
        %1315 = vmax.xlane.f32.xlu0 %v1314
        %v1316 = vpop.xlane.xlu0 %1315
        %v1317 = vsel %vm499, %v1306, -inf
        %1318 = vmax.xlane.f32.xlu0 %v1317
        %v1319 = vpop.xlane.xlu0 %1318
        %v1320 = vsub.f32 %v1222, %v1310
        %v1321 = vsub.f32 %v1250, %v1313
        %v1322 = vsub.f32 %v1278, %v1316
        %v1323 = vsub.f32 %v1306, %v1319
        %v1324 = vmul.f32 %v1320, 1.442695
        %v1325 = vpow.pop %v1324
        %v1326 = vmul.f32 %v1321, 1.442695
        %v1327 = vpow.pop %v1326
        %v1328 = vmul.f32 %v1322, 1.442695
        %v1329 = vpow.pop %v1328
        %v1330 = vmul.f32 %v1323, 1.442695
        %v1331 = vpow.pop %v1330
        %v1332 = vsel %vm499, %v1325, 0.0
        %1333 = vadd.xlane.f32.xlu0 %v1332
        %v1334 = vpop.xlane.xlu0 %1333
        %v1335 = vsel %vm499, %v1327, 0.0
        %1336 = vadd.xlane.f32.xlu0 %v1335
        %v1337 = vpop.xlane.xlu0 %1336
        %v1338 = vsel %vm499, %v1329, 0.0
        %1339 = vadd.xlane.f32.xlu0 %v1338
        %v1340 = vpop.xlane.xlu0 %1339
        %v1341 = vsel %vm499, %v1331, 0.0
        %1342 = vadd.xlane.f32.xlu0 %v1341
        %v1343 = vpop.xlane.xlu0 %1342
        %v1344 = vrcp.pop %v1334
        %v1345 = vmul.f32 %v1334, %v1344
        %v1346 = vsub.f32 1.0, %v1345
        %v1347 = vmul.f32 %v1344, %v1346
        %v1348 = vadd.f32 %v1344, %v1347
        %vm1349 = vweird.f32 %v1334
        %vm1350 = vweird.f32 %v1344
        %vm1351 = vmor %vm1349, %vm1350
        %v1352 = vsel %vm1351, %v1344, %v1348
        %v1353 = vand.u32 2147483647, %v1334
        %vm1354 = vcmp.eq.f32.partialorder %v1353, 8.507059e+37
        %v1355 = vand.u32 %v1334, 2147483648
        %v1356 = vor.u32 1.1754944e-38, %v1355
        %v1357 = vsel %vm1354, %v1356, %v1352
        %v1358 = vmul.f32 %v1325, %v1357
        %v1359 = vrcp.pop %v1337
        %v1360 = vmul.f32 %v1337, %v1359
        %v1361 = vsub.f32 1.0, %v1360
        %v1362 = vmul.f32 %v1359, %v1361
        %v1363 = vadd.f32 %v1359, %v1362
        %vm1364 = vweird.f32 %v1337
        %vm1365 = vweird.f32 %v1359
        %vm1366 = vmor %vm1364, %vm1365
        %v1367 = vsel %vm1366, %v1359, %v1363
        %v1368 = vand.u32 2147483647, %v1337
        %vm1369 = vcmp.eq.f32.partialorder %v1368, 8.507059e+37
        %v1370 = vand.u32 %v1337, 2147483648
        %v1371 = vor.u32 1.1754944e-38, %v1370
        %v1372 = vsel %vm1369, %v1371, %v1367
        %v1373 = vmul.f32 %v1327, %v1372
        %v1374 = vrcp.pop %v1340
        %v1375 = vmul.f32 %v1340, %v1374
        %v1376 = vsub.f32 1.0, %v1375
        %v1377 = vmul.f32 %v1374, %v1376
        %v1378 = vadd.f32 %v1374, %v1377
        %vm1379 = vweird.f32 %v1340
        %vm1380 = vweird.f32 %v1374
        %vm1381 = vmor %vm1379, %vm1380
        %v1382 = vsel %vm1381, %v1374, %v1378
        %v1383 = vand.u32 2147483647, %v1340
        %vm1384 = vcmp.eq.f32.partialorder %v1383, 8.507059e+37
        %v1385 = vand.u32 %v1340, 2147483648
        %v1386 = vor.u32 1.1754944e-38, %v1385
        %v1387 = vsel %vm1384, %v1386, %v1382
        %v1388 = vmul.f32 %v1329, %v1387
        %v1389 = vrcp.pop %v1343
        %v1390 = vmul.f32 %v1343, %v1389
        %v1391 = vsub.f32 1.0, %v1390
        %v1392 = vmul.f32 %v1389, %v1391
        %v1393 = vadd.f32 %v1389, %v1392
        %vm1394 = vweird.f32 %v1343
        %vm1395 = vweird.f32 %v1389
        %vm1396 = vmor %vm1394, %vm1395
        %v1397 = vsel %vm1396, %v1389, %v1393
        %v1398 = vand.u32 2147483647, %v1343
        %vm1399 = vcmp.eq.f32.partialorder %v1398, 8.507059e+37
        %v1400 = vand.u32 %v1343, 2147483648
        %v1401 = vor.u32 1.1754944e-38, %v1400
        %v1402 = vsel %vm1399, %v1401, %v1397
        %v1403 = vmul.f32 %v1331, %v1402
        %1404 = vrot.lane.b32.xlu0 %v476, 112
        %v1405 = vpop.permute.xlu0 %1404
        %v1408 = vsel %vm499, %v1358, 0
        %1410 = vmatpush.msra.mxu0 0.0
        %1411 = vmatpush.msra.mxu0 0.0
        %1412 = vmatpush.msra.mxu0 0.0
        %1413 = vmatpush.msra.mxu0 0.0
        %1414 = vmatpush.msra.mxu0 0.0
        %1415 = vmatpush.msra.mxu0 0.0
        %1416 = vmatpush.msra.mxu0 0.0
        %1417 = vmatpush.msra.mxu0 0.0
        %1418 = vmatpush.msra.mxu0 0.0
        %1419 = vmatpush.msra.mxu0 0.0
        %1420 = vmatpush.msra.mxu0 0.0
        %1421 = vmatpush.msra.mxu0 0.0
        %1422 = vmatpush.msra.mxu0 0.0
        %1423 = vmatpush.msra.mxu0 0.0
        %1424 = vmatpush.msra.mxu0 0.0
        %1425 = vmatpush.msra.mxu0 %v1405
        %1426 = vmatmul.f32.gmra.mxu0 %v1408
        %v1427 = vpop.f32.mrf.mxu0
        %v1428 = vadd.f32 0.0, %v1427
        %1429 = vdwg.mxu0
        %1430 = vrot.lane.b32.xlu0 %v479, 112
        %v1431 = vpop.permute.xlu0 %1430
        %v1434 = vsel %vm499, %v1373, 0
        %1436 = vmatpush.msra.mxu0 0.0
        %1437 = vmatpush.msra.mxu0 0.0
        %1438 = vmatpush.msra.mxu0 0.0
        %1439 = vmatpush.msra.mxu0 0.0
        %1440 = vmatpush.msra.mxu0 0.0
        %1441 = vmatpush.msra.mxu0 0.0
        %1442 = vmatpush.msra.mxu0 0.0
        %1443 = vmatpush.msra.mxu0 0.0
        %1444 = vmatpush.msra.mxu0 0.0
        %1445 = vmatpush.msra.mxu0 0.0
        %1446 = vmatpush.msra.mxu0 0.0
        %1447 = vmatpush.msra.mxu0 0.0
        %1448 = vmatpush.msra.mxu0 0.0
        %1449 = vmatpush.msra.mxu0 0.0
        %1450 = vmatpush.msra.mxu0 0.0
        %1451 = vmatpush.msra.mxu0 %v1431
        %1452 = vmatmul.f32.gmra.mxu0 %v1434
        %v1453 = vpop.f32.mrf.mxu0
        %v1454 = vadd.f32 0.0, %v1453
        %1455 = vdwg.mxu0
        %1456 = vrot.lane.b32.xlu0 %v482, 112
        %v1457 = vpop.permute.xlu0 %1456
        %v1460 = vsel %vm499, %v1388, 0
        %1462 = vmatpush.msra.mxu0 0.0
        %1463 = vmatpush.msra.mxu0 0.0
        %1464 = vmatpush.msra.mxu0 0.0
        %1465 = vmatpush.msra.mxu0 0.0
        %1466 = vmatpush.msra.mxu0 0.0
        %1467 = vmatpush.msra.mxu0 0.0
        %1468 = vmatpush.msra.mxu0 0.0
        %1469 = vmatpush.msra.mxu0 0.0
        %1470 = vmatpush.msra.mxu0 0.0
        %1471 = vmatpush.msra.mxu0 0.0
        %1472 = vmatpush.msra.mxu0 0.0
        %1473 = vmatpush.msra.mxu0 0.0
        %1474 = vmatpush.msra.mxu0 0.0
        %1475 = vmatpush.msra.mxu0 0.0
        %1476 = vmatpush.msra.mxu0 0.0
        %1477 = vmatpush.msra.mxu0 %v1457
        %1478 = vmatmul.f32.gmra.mxu0 %v1460
        %v1479 = vpop.f32.mrf.mxu0
        %v1480 = vadd.f32 0.0, %v1479
        %1481 = vdwg.mxu0
        %1482 = vrot.lane.b32.xlu0 %v485, 112
        %v1483 = vpop.permute.xlu0 %1482
        %v1486 = vsel %vm499, %v1403, 0
        %1488 = vmatpush.msra.mxu0 0.0
        %1489 = vmatpush.msra.mxu0 0.0
        %1490 = vmatpush.msra.mxu0 0.0
        %1491 = vmatpush.msra.mxu0 0.0
        %1492 = vmatpush.msra.mxu0 0.0
        %1493 = vmatpush.msra.mxu0 0.0
        %1494 = vmatpush.msra.mxu0 0.0
        %1495 = vmatpush.msra.mxu0 0.0
        %1496 = vmatpush.msra.mxu0 0.0
        %1497 = vmatpush.msra.mxu0 0.0
        %1498 = vmatpush.msra.mxu0 0.0
        %1499 = vmatpush.msra.mxu0 0.0
        %1500 = vmatpush.msra.mxu0 0.0
        %1501 = vmatpush.msra.mxu0 0.0
        %1502 = vmatpush.msra.mxu0 0.0
        %1503 = vmatpush.msra.mxu0 %v1483
        %1504 = vmatmul.f32.gmra.mxu0 %v1486
        %v1505 = vpop.f32.mrf.mxu0
        %v1506 = vadd.f32 0.0, %v1505
        %1507 = vdwg.mxu0
        %1508 = vrot.lane.b32.xlu0 %v321, 32
        %v1509 = vpop.permute.xlu0 %1508
        %v1512 = vsel %vm499, %v1428, 0
        %v1515 = vsel %vm499, %v1454, 0
        %v1518 = vsel %vm499, %v1480, 0
        %v1521 = vsel %vm499, %v1506, 0
        %1523 = vmatpush.msra.mxu0 0.0
        %1524 = vmatpush.msra.mxu0 0.0
        %1525 = vmatpush.msra.mxu0 0.0
        %1526 = vmatpush.msra.mxu0 0.0
        %1527 = vmatpush.msra.mxu0 0.0
        %1528 = vmatpush.msra.mxu0 0.0
        %1529 = vmatpush.msra.mxu0 0.0
        %1530 = vmatpush.msra.mxu0 0.0
        %1531 = vmatpush.msra.mxu0 0.0
        %1532 = vmatpush.msra.mxu0 0.0
        %1533 = vmatpush.msra.mxu0 0.0
        %1534 = vmatpush.msra.mxu0 0.0
        %1535 = vmatpush.msra.mxu0 0.0
        %1536 = vmatpush.msra.mxu0 0.0
        %1537 = vmatpush.msra.mxu0 0.0
        %1538 = vmatpush.msra.mxu0 %v1509
        %1539 = vmatmul.f32.gmra.mxu0 %v1512
        %v1540 = vpop.f32.mrf.mxu0
        %v1541 = vadd.f32 0.0, %v1540
        %1542 = vmatmul.f32.gmra.mxu0 %v1515
        %v1543 = vpop.f32.mrf.mxu0
        %v1544 = vadd.f32 0.0, %v1543
        %1545 = vmatmul.f32.gmra.mxu0 %v1518
        %v1546 = vpop.f32.mrf.mxu0
        %v1547 = vadd.f32 0.0, %v1546
        %1548 = vmatmul.f32.gmra.mxu0 %v1521
        %v1549 = vpop.f32.mrf.mxu0
        %v1550 = vadd.f32 0.0, %v1549
        %1551 = vdwg.mxu0
        %v1552 = vadd.f32 %v1185, %v1541
        %v1553 = vadd.f32 %v1188, %v1544
        %v1554 = vadd.f32 %v1191, %v1547
        %v1555 = vadd.f32 %v1194, %v1550
        %1556 = vrot.lane.b32.xlu0 %v358, 104
        %v1557 = vpop.permute.xlu0 %1556
        %1558 = vrot.lane.b32.xlu0 %v419, 104
        %v1559 = vpop.permute.xlu0 %1558
        %v1560 = vsel %vm499, %v1557, 0
        %v1562 = vsel %vm499, %v1559, 0
        %1564 = vmatpush.xpose.msra.mxu0 0.0
        %1565 = vmatpush.xpose.msra.mxu0 0.0
        %1566 = vmatpush.xpose.msra.mxu0 0.0
        %1567 = vmatpush.xpose.msra.mxu0 0.0
        %1568 = vmatpush.xpose.msra.mxu0 0.0
        %1569 = vmatpush.xpose.msra.mxu0 0.0
        %1570 = vmatpush.xpose.msra.mxu0 0.0
        %1571 = vmatpush.xpose.msra.mxu0 0.0
        %1572 = vmatpush.xpose.msra.mxu0 0.0
        %1573 = vmatpush.xpose.msra.mxu0 0.0
        %1574 = vmatpush.xpose.msra.mxu0 0.0
        %1575 = vmatpush.xpose.msra.mxu0 0.0
        %1576 = vmatpush.xpose.msra.mxu0 0.0
        %1577 = vmatpush.xpose.msra.mxu0 0.0
        %1578 = vmatpush.xpose.msra.mxu0 0.0
        %1579 = vmatpush.xpose.msra.mxu0 %v1562
        %1580 = vmatmul.f32.gmra.mxu0 %v1560
        %v1581 = vpop.f32.mrf.mxu0
        %v1582 = vadd.f32 %v495, %v1581
        %1583 = vdwg.mxu0
        %1584 = vrot.lane.b32.xlu0 %v361, 104
        %v1585 = vpop.permute.xlu0 %1584
        %1586 = vrot.lane.b32.xlu0 %v422, 104
        %v1587 = vpop.permute.xlu0 %1586
        %v1588 = vsel %vm499, %v1585, 0
        %v1590 = vsel %vm499, %v1587, 0
        %1592 = vmatpush.xpose.msra.mxu0 0.0
        %1593 = vmatpush.xpose.msra.mxu0 0.0
        %1594 = vmatpush.xpose.msra.mxu0 0.0
        %1595 = vmatpush.xpose.msra.mxu0 0.0
        %1596 = vmatpush.xpose.msra.mxu0 0.0
        %1597 = vmatpush.xpose.msra.mxu0 0.0
        %1598 = vmatpush.xpose.msra.mxu0 0.0
        %1599 = vmatpush.xpose.msra.mxu0 0.0
        %1600 = vmatpush.xpose.msra.mxu0 0.0
        %1601 = vmatpush.xpose.msra.mxu0 0.0
        %1602 = vmatpush.xpose.msra.mxu0 0.0
        %1603 = vmatpush.xpose.msra.mxu0 0.0
        %1604 = vmatpush.xpose.msra.mxu0 0.0
        %1605 = vmatpush.xpose.msra.mxu0 0.0
        %1606 = vmatpush.xpose.msra.mxu0 0.0
        %1607 = vmatpush.xpose.msra.mxu0 %v1590
        %1608 = vmatmul.f32.gmra.mxu0 %v1588
        %v1609 = vpop.f32.mrf.mxu0
        %v1610 = vadd.f32 %v496, %v1609
        %1611 = vdwg.mxu0
        %1612 = vrot.lane.b32.xlu0 %v364, 104
        %v1613 = vpop.permute.xlu0 %1612
        %1614 = vrot.lane.b32.xlu0 %v425, 104
        %v1615 = vpop.permute.xlu0 %1614
        %v1616 = vsel %vm499, %v1613, 0
        %v1618 = vsel %vm499, %v1615, 0
        %1620 = vmatpush.xpose.msra.mxu0 0.0
        %1621 = vmatpush.xpose.msra.mxu0 0.0
        %1622 = vmatpush.xpose.msra.mxu0 0.0
        %1623 = vmatpush.xpose.msra.mxu0 0.0
        %1624 = vmatpush.xpose.msra.mxu0 0.0
        %1625 = vmatpush.xpose.msra.mxu0 0.0
        %1626 = vmatpush.xpose.msra.mxu0 0.0
        %1627 = vmatpush.xpose.msra.mxu0 0.0
        %1628 = vmatpush.xpose.msra.mxu0 0.0
        %1629 = vmatpush.xpose.msra.mxu0 0.0
        %1630 = vmatpush.xpose.msra.mxu0 0.0
        %1631 = vmatpush.xpose.msra.mxu0 0.0
        %1632 = vmatpush.xpose.msra.mxu0 0.0
        %1633 = vmatpush.xpose.msra.mxu0 0.0
        %1634 = vmatpush.xpose.msra.mxu0 0.0
        %1635 = vmatpush.xpose.msra.mxu0 %v1618
        %1636 = vmatmul.f32.gmra.mxu0 %v1616
        %v1637 = vpop.f32.mrf.mxu0
        %v1638 = vadd.f32 %v497, %v1637
        %1639 = vdwg.mxu0
        %1640 = vrot.lane.b32.xlu0 %v367, 104
        %v1641 = vpop.permute.xlu0 %1640
        %1642 = vrot.lane.b32.xlu0 %v428, 104
        %v1643 = vpop.permute.xlu0 %1642
        %v1644 = vsel %vm499, %v1641, 0
        %v1646 = vsel %vm499, %v1643, 0
        %1648 = vmatpush.xpose.msra.mxu0 0.0
        %1649 = vmatpush.xpose.msra.mxu0 0.0
        %1650 = vmatpush.xpose.msra.mxu0 0.0
        %1651 = vmatpush.xpose.msra.mxu0 0.0
        %1652 = vmatpush.xpose.msra.mxu0 0.0
        %1653 = vmatpush.xpose.msra.mxu0 0.0
        %1654 = vmatpush.xpose.msra.mxu0 0.0
        %1655 = vmatpush.xpose.msra.mxu0 0.0
        %1656 = vmatpush.xpose.msra.mxu0 0.0
        %1657 = vmatpush.xpose.msra.mxu0 0.0
        %1658 = vmatpush.xpose.msra.mxu0 0.0
        %1659 = vmatpush.xpose.msra.mxu0 0.0
        %1660 = vmatpush.xpose.msra.mxu0 0.0
        %1661 = vmatpush.xpose.msra.mxu0 0.0
        %1662 = vmatpush.xpose.msra.mxu0 0.0
        %1663 = vmatpush.xpose.msra.mxu0 %v1646
        %1664 = vmatmul.f32.gmra.mxu0 %v1644
        %v1665 = vpop.f32.mrf.mxu0
        %v1666 = vadd.f32 %v498, %v1665
        %1667 = vdwg.mxu0
        %v1668 = vsel %vm499, %v1582, -inf
        %1669 = vmax.xlane.f32.xlu0 %v1668
        %v1670 = vpop.xlane.xlu0 %1669
        %v1671 = vsel %vm499, %v1610, -inf
        %1672 = vmax.xlane.f32.xlu0 %v1671
        %v1673 = vpop.xlane.xlu0 %1672
        %v1674 = vsel %vm499, %v1638, -inf
        %1675 = vmax.xlane.f32.xlu0 %v1674
        %v1676 = vpop.xlane.xlu0 %1675
        %v1677 = vsel %vm499, %v1666, -inf
        %1678 = vmax.xlane.f32.xlu0 %v1677
        %v1679 = vpop.xlane.xlu0 %1678
        %v1680 = vsub.f32 %v1582, %v1670
        %v1681 = vsub.f32 %v1610, %v1673
        %v1682 = vsub.f32 %v1638, %v1676
        %v1683 = vsub.f32 %v1666, %v1679
        %v1684 = vmul.f32 %v1680, 1.442695
        %v1685 = vpow.pop %v1684
        %v1686 = vmul.f32 %v1681, 1.442695
        %v1687 = vpow.pop %v1686
        %v1688 = vmul.f32 %v1682, 1.442695
        %v1689 = vpow.pop %v1688
        %v1690 = vmul.f32 %v1683, 1.442695
        %v1691 = vpow.pop %v1690
        %v1692 = vsel %vm499, %v1685, 0.0
        %1693 = vadd.xlane.f32.xlu0 %v1692
        %v1694 = vpop.xlane.xlu0 %1693
        %v1695 = vsel %vm499, %v1687, 0.0
        %1696 = vadd.xlane.f32.xlu0 %v1695
        %v1697 = vpop.xlane.xlu0 %1696
        %v1698 = vsel %vm499, %v1689, 0.0
        %1699 = vadd.xlane.f32.xlu0 %v1698
        %v1700 = vpop.xlane.xlu0 %1699
        %v1701 = vsel %vm499, %v1691, 0.0
        %1702 = vadd.xlane.f32.xlu0 %v1701
        %v1703 = vpop.xlane.xlu0 %1702
        %v1704 = vrcp.pop %v1694
        %v1705 = vmul.f32 %v1694, %v1704
        %v1706 = vsub.f32 1.0, %v1705
        %v1707 = vmul.f32 %v1704, %v1706
        %v1708 = vadd.f32 %v1704, %v1707
        %vm1709 = vweird.f32 %v1694
        %vm1710 = vweird.f32 %v1704
        %vm1711 = vmor %vm1709, %vm1710
        %v1712 = vsel %vm1711, %v1704, %v1708
        %v1713 = vand.u32 2147483647, %v1694
        %vm1714 = vcmp.eq.f32.partialorder %v1713, 8.507059e+37
        %v1715 = vand.u32 %v1694, 2147483648
        %v1716 = vor.u32 1.1754944e-38, %v1715
        %v1717 = vsel %vm1714, %v1716, %v1712
        %v1718 = vmul.f32 %v1685, %v1717
        %v1719 = vrcp.pop %v1697
        %v1720 = vmul.f32 %v1697, %v1719
        %v1721 = vsub.f32 1.0, %v1720
        %v1722 = vmul.f32 %v1719, %v1721
        %v1723 = vadd.f32 %v1719, %v1722
        %vm1724 = vweird.f32 %v1697
        %vm1725 = vweird.f32 %v1719
        %vm1726 = vmor %vm1724, %vm1725
        %v1727 = vsel %vm1726, %v1719, %v1723
        %v1728 = vand.u32 2147483647, %v1697
        %vm1729 = vcmp.eq.f32.partialorder %v1728, 8.507059e+37
        %v1730 = vand.u32 %v1697, 2147483648
        %v1731 = vor.u32 1.1754944e-38, %v1730
        %v1732 = vsel %vm1729, %v1731, %v1727
        %v1733 = vmul.f32 %v1687, %v1732
        %v1734 = vrcp.pop %v1700
        %v1735 = vmul.f32 %v1700, %v1734
        %v1736 = vsub.f32 1.0, %v1735
        %v1737 = vmul.f32 %v1734, %v1736
        %v1738 = vadd.f32 %v1734, %v1737
        %vm1739 = vweird.f32 %v1700
        %vm1740 = vweird.f32 %v1734
        %vm1741 = vmor %vm1739, %vm1740
        %v1742 = vsel %vm1741, %v1734, %v1738
        %v1743 = vand.u32 2147483647, %v1700
        %vm1744 = vcmp.eq.f32.partialorder %v1743, 8.507059e+37
        %v1745 = vand.u32 %v1700, 2147483648
        %v1746 = vor.u32 1.1754944e-38, %v1745
        %v1747 = vsel %vm1744, %v1746, %v1742
        %v1748 = vmul.f32 %v1689, %v1747
        %v1749 = vrcp.pop %v1703
        %v1750 = vmul.f32 %v1703, %v1749
        %v1751 = vsub.f32 1.0, %v1750
        %v1752 = vmul.f32 %v1749, %v1751
        %v1753 = vadd.f32 %v1749, %v1752
        %vm1754 = vweird.f32 %v1703
        %vm1755 = vweird.f32 %v1749
        %vm1756 = vmor %vm1754, %vm1755
        %v1757 = vsel %vm1756, %v1749, %v1753
        %v1758 = vand.u32 2147483647, %v1703
        %vm1759 = vcmp.eq.f32.partialorder %v1758, 8.507059e+37
        %v1760 = vand.u32 %v1703, 2147483648
        %v1761 = vor.u32 1.1754944e-38, %v1760
        %v1762 = vsel %vm1759, %v1761, %v1757
        %v1763 = vmul.f32 %v1691, %v1762
        %1764 = vrot.lane.b32.xlu0 %v476, 104
        %v1765 = vpop.permute.xlu0 %1764
        %v1768 = vsel %vm499, %v1718, 0
        %1770 = vmatpush.msra.mxu0 0.0
        %1771 = vmatpush.msra.mxu0 0.0
        %1772 = vmatpush.msra.mxu0 0.0
        %1773 = vmatpush.msra.mxu0 0.0
        %1774 = vmatpush.msra.mxu0 0.0
        %1775 = vmatpush.msra.mxu0 0.0
        %1776 = vmatpush.msra.mxu0 0.0
        %1777 = vmatpush.msra.mxu0 0.0
        %1778 = vmatpush.msra.mxu0 0.0
        %1779 = vmatpush.msra.mxu0 0.0
        %1780 = vmatpush.msra.mxu0 0.0
        %1781 = vmatpush.msra.mxu0 0.0
        %1782 = vmatpush.msra.mxu0 0.0
        %1783 = vmatpush.msra.mxu0 0.0
        %1784 = vmatpush.msra.mxu0 0.0
        %1785 = vmatpush.msra.mxu0 %v1765
        %1786 = vmatmul.f32.gmra.mxu0 %v1768
        %v1787 = vpop.f32.mrf.mxu0
        %v1788 = vadd.f32 0.0, %v1787
        %1789 = vdwg.mxu0
        %1790 = vrot.lane.b32.xlu0 %v479, 104
        %v1791 = vpop.permute.xlu0 %1790
        %v1794 = vsel %vm499, %v1733, 0
        %1796 = vmatpush.msra.mxu0 0.0
        %1797 = vmatpush.msra.mxu0 0.0
        %1798 = vmatpush.msra.mxu0 0.0
        %1799 = vmatpush.msra.mxu0 0.0
        %1800 = vmatpush.msra.mxu0 0.0
        %1801 = vmatpush.msra.mxu0 0.0
        %1802 = vmatpush.msra.mxu0 0.0
        %1803 = vmatpush.msra.mxu0 0.0
        %1804 = vmatpush.msra.mxu0 0.0
        %1805 = vmatpush.msra.mxu0 0.0
        %1806 = vmatpush.msra.mxu0 0.0
        %1807 = vmatpush.msra.mxu0 0.0
        %1808 = vmatpush.msra.mxu0 0.0
        %1809 = vmatpush.msra.mxu0 0.0
        %1810 = vmatpush.msra.mxu0 0.0
        %1811 = vmatpush.msra.mxu0 %v1791
        %1812 = vmatmul.f32.gmra.mxu0 %v1794
        %v1813 = vpop.f32.mrf.mxu0
        %v1814 = vadd.f32 0.0, %v1813
        %1815 = vdwg.mxu0
        %1816 = vrot.lane.b32.xlu0 %v482, 104
        %v1817 = vpop.permute.xlu0 %1816
        %v1820 = vsel %vm499, %v1748, 0
        %1822 = vmatpush.msra.mxu0 0.0
        %1823 = vmatpush.msra.mxu0 0.0
        %1824 = vmatpush.msra.mxu0 0.0
        %1825 = vmatpush.msra.mxu0 0.0
        %1826 = vmatpush.msra.mxu0 0.0
        %1827 = vmatpush.msra.mxu0 0.0
        %1828 = vmatpush.msra.mxu0 0.0
        %1829 = vmatpush.msra.mxu0 0.0
        %1830 = vmatpush.msra.mxu0 0.0
        %1831 = vmatpush.msra.mxu0 0.0
        %1832 = vmatpush.msra.mxu0 0.0
        %1833 = vmatpush.msra.mxu0 0.0
        %1834 = vmatpush.msra.mxu0 0.0
        %1835 = vmatpush.msra.mxu0 0.0
        %1836 = vmatpush.msra.mxu0 0.0
        %1837 = vmatpush.msra.mxu0 %v1817
        %1838 = vmatmul.f32.gmra.mxu0 %v1820
        %v1839 = vpop.f32.mrf.mxu0
        %v1840 = vadd.f32 0.0, %v1839
        %1841 = vdwg.mxu0
        %1842 = vrot.lane.b32.xlu0 %v485, 104
        %v1843 = vpop.permute.xlu0 %1842
        %v1846 = vsel %vm499, %v1763, 0
        %1848 = vmatpush.msra.mxu0 0.0
        %1849 = vmatpush.msra.mxu0 0.0
        %1850 = vmatpush.msra.mxu0 0.0
        %1851 = vmatpush.msra.mxu0 0.0
        %1852 = vmatpush.msra.mxu0 0.0
        %1853 = vmatpush.msra.mxu0 0.0
        %1854 = vmatpush.msra.mxu0 0.0
        %1855 = vmatpush.msra.mxu0 0.0
        %1856 = vmatpush.msra.mxu0 0.0
        %1857 = vmatpush.msra.mxu0 0.0
        %1858 = vmatpush.msra.mxu0 0.0
        %1859 = vmatpush.msra.mxu0 0.0
        %1860 = vmatpush.msra.mxu0 0.0
        %1861 = vmatpush.msra.mxu0 0.0
        %1862 = vmatpush.msra.mxu0 0.0
        %1863 = vmatpush.msra.mxu0 %v1843
        %1864 = vmatmul.f32.gmra.mxu0 %v1846
        %v1865 = vpop.f32.mrf.mxu0
        %v1866 = vadd.f32 0.0, %v1865
        %1867 = vdwg.mxu0
        %1868 = vrot.lane.b32.xlu0 %v322, 32
        %v1869 = vpop.permute.xlu0 %1868
        %v1872 = vsel %vm499, %v1788, 0
        %v1875 = vsel %vm499, %v1814, 0
        %v1878 = vsel %vm499, %v1840, 0
        %v1881 = vsel %vm499, %v1866, 0
        %1883 = vmatpush.msra.mxu0 0.0
        %1884 = vmatpush.msra.mxu0 0.0
        %1885 = vmatpush.msra.mxu0 0.0
        %1886 = vmatpush.msra.mxu0 0.0
        %1887 = vmatpush.msra.mxu0 0.0
        %1888 = vmatpush.msra.mxu0 0.0
        %1889 = vmatpush.msra.mxu0 0.0
        %1890 = vmatpush.msra.mxu0 0.0
        %1891 = vmatpush.msra.mxu0 0.0
        %1892 = vmatpush.msra.mxu0 0.0
        %1893 = vmatpush.msra.mxu0 0.0
        %1894 = vmatpush.msra.mxu0 0.0
        %1895 = vmatpush.msra.mxu0 0.0
        %1896 = vmatpush.msra.mxu0 0.0
        %1897 = vmatpush.msra.mxu0 0.0
        %1898 = vmatpush.msra.mxu0 %v1869
        %1899 = vmatmul.f32.gmra.mxu0 %v1872
        %v1900 = vpop.f32.mrf.mxu0
        %v1901 = vadd.f32 0.0, %v1900
        %1902 = vmatmul.f32.gmra.mxu0 %v1875
        %v1903 = vpop.f32.mrf.mxu0
        %v1904 = vadd.f32 0.0, %v1903
        %1905 = vmatmul.f32.gmra.mxu0 %v1878
        %v1906 = vpop.f32.mrf.mxu0
        %v1907 = vadd.f32 0.0, %v1906
        %1908 = vmatmul.f32.gmra.mxu0 %v1881
        %v1909 = vpop.f32.mrf.mxu0
        %v1910 = vadd.f32 0.0, %v1909
        %1911 = vdwg.mxu0
        %v1912 = vadd.f32 %v1552, %v1901
        %v1913 = vadd.f32 %v1553, %v1904
        %v1914 = vadd.f32 %v1554, %v1907
        %v1915 = vadd.f32 %v1555, %v1910
        %v1916 = vld [vmem:[%s5] sm:$0x1]
        %v1918 = vperm.slane %v1916, 0
        %v1920 = vadd.f32 %v1912, %v1918
        %v1921 = vadd.f32 %v1913, %v1918
        %v1922 = vadd.f32 %v1914, %v1918
        %v1923 = vadd.f32 %v1915, %v1918
        %1924 = vst.msk [vmem:[%s293] sm:$0xff] %vm327, %v1920
        %1925 = vst.msk [vmem:[%s293 + $0x8] sm:$0xff] %vm327, %v1921
        %1926 = vst.msk [vmem:[%s293 + $0x10] sm:$0xff] %vm327, %v1922
        %1927 = vst.msk [vmem:[%s293 + $0x18] sm:$0xff] %vm327, %v1923
        %s1928 = sand.u32 %s174, 1
        %s1929 = scalar_lea.sflag [#allocation3], %s1928
        %s1930 = sand.u32 %s174, 1
        %s1931 = smul.addr %s1930, 32
        %s1932 = scalar_lea.vmem [#allocation2], %s1931
        // Predicated region
        $region45: #{self_attention_pallas.1} parent=43 // pred_check
          %p1933 = pneg %p184
        $region46: #{self_attention_pallas.1} parent=43 // pred_check_branch
          %1935 = sbr.rel (%p1933) target = $region48
        $region47: #{self_attention_pallas.1} parent=43 // pred_region
          %s1936 = smul.u32 4, %s20
          %1938 = vsyncadd %s1929, 0
          %s1939 = smul.addr %s1936, 8
          %s1940 = scalar_lea.hbm %s6, %s1939
          %s1941 = sshll.u32 %s1932, 4
          %s1942 = int_to_ptr.vmem [resolvable:$true] %s1941
          %s1943 = sshll.u32 %s1940, 4
          %s1944 = int_to_ptr.hbm [resolvable:$true] %s1943
          %1949 = dma.vmem_to_hbm [thread:$0]  %s1942, 512, %s1944, %s1929, 128, 128, 8
        $region48: #{self_attention_pallas.1} parent=43 // pred_fallthru
          _
      $region44: #{self_attention_pallas.1} parent=5 // pred_fallthru
        _
      %p1950 = scmp.le.s32.totalorder 2, %s15
      // Predicated region
      $region49: #{self_attention_pallas.1} parent=5 // pred_check
        %p1951 = pneg %p1950
      $region50: #{self_attention_pallas.1} parent=5 // pred_check_branch
        %1953 = sbr.rel (%p1951) target = $region52
      $region51: #{self_attention_pallas.1} parent=5 // pred_region
        %s1954 = ssub.s32 %s15, 2
        // Predicated region
        $region53: #{self_attention_pallas.1} parent=51 // pred_check
          %p1955 = pneg %p190
        $region54: #{self_attention_pallas.1} parent=51 // pred_check_branch
          %1957 = sbr.rel (%p1955) target = $region56
        $region55: #{self_attention_pallas.1} parent=51 // pred_region
          %s1958 = sand.u32 %s175, 1
          %s1959 = scalar_lea.sflag [#allocation3], %s1958
          %s1960 = sand.u32 %s175, 1
          %s1961 = smul.addr %s1960, 32
          %s1962 = scalar_lea.vmem [#allocation2], %s1961
          %1964 = dma.done %s1959, 512
        $region56: #{self_attention_pallas.1} parent=51 // pred_fallthru
          _
      $region52: #{self_attention_pallas.1} parent=5 // pred_fallthru
        _
    $region6: #{self_attention_pallas.1} parent=1 // loop_footer
      %s19 = sadd.s32 1, %s15
    $region7: #{self_attention_pallas.1} parent=1 // loop_footer_branch
      %14 = sbr.rel target = $region3
    $region8: #{self_attention_pallas.1} parent=1 // loop_exit
      _
    %1965 = vsyncpa [#allocation3], 1
    %s1966 = scalar_lea.sflag [#allocation3], 1
    %1967 = vsyncpa %s1966, 1

</llo_original>
